<compile_context>
chip_gen: v7x
topology: tpu7x:2x2x1
jax: 0.10.0
libtpu: 0.0.40
codegen_flags: <defaults>
</compile_context>

<pallas_src>
import functools
import math

import jax
import jax.numpy as jnp
from jax import lax
from jax.experimental import pallas as pl
from jax.experimental.pallas import tpu as pltpu


# ---------------------------------------------------------------------------
# helpers
# ---------------------------------------------------------------------------

def _round_up(x, m):
    return ((x + m - 1) // m) * m


def _row_tiling(M, cap=256):
    """Row tile (multiple of 8, <= cap) and padded row count."""
    tm = min(cap, _round_up(M, 8))
    return tm, _round_up(M, tm)


def _k_tiling(K, cap=512):
    """Contraction tile and padded contraction size for the fused projection."""
    if K <= cap:
        kp = _round_up(K, 8)
        return kp, kp
    return cap, _round_up(K, cap)


def _block_diag(w):
    """(R, din, dout) -> block-diagonal (R*din, R*dout)."""
    R, din, dout = w.shape
    eye = jnp.eye(R, dtype=w.dtype)
    return (w[:, :, None, :] * eye[:, None, :, None]).reshape(R * din, R * dout)


# ---------------------------------------------------------------------------
# 1) fused q/k/v/in_ projection: K-tiled matmul, one lane-dense padded output
# ---------------------------------------------------------------------------

def _proj_kernel(x_ref, w_ref, b_ref, o_ref, acc_ref):
    @pl.when(pl.program_id(1) == 0)
    def _():
        acc_ref[...] = jnp.zeros_like(acc_ref)

    acc_ref[...] += jnp.dot(x_ref[...], w_ref[...],
                            preferred_element_type=jnp.float32)

    @pl.when(pl.program_id(1) == pl.num_programs(1) - 1)
    def _():
        o_ref[...] = (acc_ref[...] + b_ref[...]).astype(o_ref.dtype)


def fused_projection(x, w, b, *, tile_rows=256):
    """x: (M, K) bf16; w: (Kp, Np) bf16 (pre-padded); b: (1, Np) f32 -> (M, Np) bf16."""
    M, K = x.shape
    TK, Kp = _k_tiling(K)
    assert w.shape[0] == Kp
    Np = w.shape[1]
    if Kp > K:
        x = jnp.pad(x, ((0, 0), (0, Kp - K)))
    TM, Mp = _row_tiling(M, tile_rows)
    if Mp > M:
        x = jnp.pad(x, ((0, Mp - M), (0, 0)))
    out = pl.pallas_call(
        _proj_kernel,
        out_shape=jax.ShapeDtypeStruct((Mp, Np), jnp.bfloat16),
        grid=(Mp // TM, Kp // TK),
        in_specs=[
            pl.BlockSpec((TM, TK), lambda m, k: (m, k)),
            pl.BlockSpec((TK, Np), lambda m, k: (k, 0)),
            pl.BlockSpec((1, Np), lambda m, k: (0, 0)),
        ],
        out_specs=pl.BlockSpec((TM, Np), lambda m, k: (m, 0)),
        scratch_shapes=[pltpu.VMEM((TM, Np), jnp.float32)],
        compiler_params=pltpu.CompilerParams(
            dimension_semantics=("parallel", "arbitrary"),
            vmem_limit_bytes=32 * 1024 * 1024),
    )(x, w, b)
    return out[:M]


# ---------------------------------------------------------------------------
# 2) attention: all (rule*head) heads per batch element, batched einsums
# ---------------------------------------------------------------------------

def _attn_kernel(q_ref, k_ref, v_ref, o_ref, *, scale):
    q = q_ref[0]                      # (RH, n, hd) bf16
    k = k_ref[0]
    v = v_ref[0]
    n = q.shape[1]
    s = jnp.einsum("hqd,hkd->hqk", q, k,
                   preferred_element_type=jnp.float32) * scale
    row = lax.broadcasted_iota(jnp.int32, (n, n), 0)
    col = lax.broadcasted_iota(jnp.int32, (n, n), 1)
    s = s + jnp.where(row == col, -jnp.inf, 0.0)[None, :, :]   # mask self
    s = s - jnp.max(s, axis=-1, keepdims=True)
    p = jnp.exp(s)
    p = p * pl.reciprocal(jnp.sum(p, axis=-1, keepdims=True), approx=True)
    o = jnp.einsum("hqk,hkd->hqd", p.astype(v.dtype), v,
                   preferred_element_type=jnp.float32)
    o_ref[0] = o.astype(o_ref.dtype)


def attention_pallas(q, k, v, *, scale):
    """q, k, v: (bsz, RH, n, hd) bf16 -> (bsz, RH, n, hd) bf16."""
    bsz, RH, n, hd = q.shape
    spec = pl.BlockSpec((1, RH, n, hd), lambda b: (b, 0, 0, 0))
    kernel = functools.partial(_attn_kernel, scale=scale)
    return pl.pallas_call(
        kernel,
        out_shape=jax.ShapeDtypeStruct((bsz, RH, n, hd), q.dtype),
        grid=(bsz,),
        in_specs=[spec, spec, spec],
        out_specs=spec,
        compiler_params=pltpu.CompilerParams(
            dimension_semantics=("parallel",),
            vmem_limit_bytes=32 * 1024 * 1024),
    )(q, k, v)


# ---------------------------------------------------------------------------
# 3) out_proj: block-diagonal GroupLinear -> ReLU -> GroupLinear (concat folded)
# ---------------------------------------------------------------------------

def _group_mlp_kernel(a_ref, i_ref, w1a_ref, w1i_ref, b1_ref, w2_ref, b2_ref, o_ref):
    h = (jnp.dot(a_ref[...], w1a_ref[...], preferred_element_type=jnp.float32)
         + jnp.dot(i_ref[...], w1i_ref[...], preferred_element_type=jnp.float32)
         + b1_ref[...])
    h = jnp.maximum(h, 0.0).astype(w2_ref.dtype)
    o = jnp.dot(h, w2_ref[...], preferred_element_type=jnp.float32) + b2_ref[...]
    o_ref[...] = o.astype(o_ref.dtype)


def group_mlp_pallas(attn2, in2, w1a, w1i, b1, w2, b2, *, tile_rows=256):
    M, A = attn2.shape
    I = in2.shape[1]
    H1 = w1a.shape[1]
    O = w2.shape[1]
    TM, Mp = _row_tiling(M, tile_rows)
    if Mp > M:
        attn2 = jnp.pad(attn2, ((0, Mp - M), (0, 0)))
        in2 = jnp.pad(in2, ((0, Mp - M), (0, 0)))
    out = pl.pallas_call(
        _group_mlp_kernel,
        out_shape=jax.ShapeDtypeStruct((Mp, O), jnp.float32),
        grid=(Mp // TM,),
        in_specs=[
            pl.BlockSpec((TM, A), lambda m: (m, 0)),
            pl.BlockSpec((TM, I), lambda m: (m, 0)),
            pl.BlockSpec((A, H1), lambda m: (0, 0)),   # weights resident across M tiles
            pl.BlockSpec((I, H1), lambda m: (0, 0)),
            pl.BlockSpec((1, H1), lambda m: (0, 0)),
            pl.BlockSpec((H1, O), lambda m: (0, 0)),
            pl.BlockSpec((1, O), lambda m: (0, 0)),
        ],
        out_specs=pl.BlockSpec((TM, O), lambda m: (m, 0)),
        compiler_params=pltpu.CompilerParams(
            dimension_semantics=("parallel",),
            vmem_limit_bytes=32 * 1024 * 1024),
    )(attn2, in2, w1a, w1i, b1, w2, b2)
    return out[:M]


# ---------------------------------------------------------------------------
# Parameter construction (deterministic, in-script; mirrors PyTorch init)
# ---------------------------------------------------------------------------

def _uniform(key, shape, bound):
    return jax.random.uniform(key, shape, jnp.float32, -bound, bound)


def init_params(key, dim, att_dim, num_heads, num_rules, op):
    head_dim = att_dim // (num_heads * num_rules)
    proj = num_heads * num_rules * head_dim
    num = 2 * dim * (num_rules * num_heads * (att_dim + dim) + att_dim)
    denom = num_rules * (att_dim * (num_heads + 1) + num_rules * num_heads * dim)
    inter = int(num / denom)
    out_dim = dim if op else dim + 1
    g1_in = head_dim * (num_heads + 1)

    ks = jax.random.split(key, 16)
    bl = 1.0 / math.sqrt(dim)
    p = {
        "wq": _uniform(ks[0], (dim, proj), bl), "bq": _uniform(ks[1], (proj,), bl),
        "wk": _uniform(ks[2], (dim, proj), bl), "bk": _uniform(ks[3], (proj,), bl),
        "wv": _uniform(ks[4], (dim, proj), bl), "bv": _uniform(ks[5], (proj,), bl),
        "win": _uniform(ks[6], (dim, head_dim * num_rules), bl),
        "bin": _uniform(ks[7], (head_dim * num_rules,), bl),
        # GroupLinearLayer 1: w (R, hd*(H+1), inter), bias per rule (R, inter)
        "gw1": _uniform(ks[8], (num_rules, g1_in, inter), 1.0 / math.sqrt(g1_in)),
        "gb1": _uniform(ks[9], (num_rules, inter), 1.0 / math.sqrt(g1_in)),
        # GroupLinearLayer 2: w (R, inter, out_dim), bias per rule (R, out_dim)
        "gw2": _uniform(ks[10], (num_rules, inter, out_dim), 1.0 / math.sqrt(inter)),
        "gb2": _uniform(ks[11], (num_rules, out_dim), 1.0 / math.sqrt(inter)),
    }
    if op:
        bs1 = 1.0 / math.sqrt(num_rules)
        bs2 = 1.0 / math.sqrt(head_dim)
        p.update({
            "ws1": _uniform(ks[12], (num_rules, head_dim), bs1),
            "bs1": _uniform(ks[13], (head_dim,), bs1),
            "ws2": _uniform(ks[14], (head_dim, num_rules), bs2),
            "bs2": _uniform(ks[15], (num_rules,), bs2),
        })
    return p


def prepare_params(p, *, num_heads, num_rules):
    """One-time re-layout: fused padded projection, block-diagonal group MLP, bf16."""
    dim = p["wq"].shape[0]
    head_dim = p["win"].shape[1] // num_rules
    h_hd = num_heads * head_dim

    # fused q|k|v|in_ projection: pad K to the tiling and N to 128-lane multiple
    w = jnp.concatenate([p["wq"], p["wk"], p["wv"], p["win"]], axis=1)
    b = jnp.concatenate([p["bq"], p["bk"], p["bv"], p["bin"]])[None, :]
    _, kp = _k_tiling(dim)
    npad = _round_up(w.shape[1], 128)
    w = jnp.pad(w, ((0, kp - dim), (0, npad - w.shape[1])))
    b = jnp.pad(b, ((0, 0), (0, npad - b.shape[1])))

    # block-diagonal group MLP (torch.cat folded by splitting w1 rows), lane-padded
    w1a = _block_diag(p["gw1"][:, :h_hd, :])     # (R*H*hd, R*inter)
    w1i = _block_diag(p["gw1"][:, h_hd:, :])     # (R*hd,   R*inter)
    b1 = p["gb1"].reshape(1, -1)                 # (1, R*inter)
    w2 = _block_diag(p["gw2"])                   # (R*inter, R*out_dim)
    b2 = p["gb2"].reshape(1, -1)                 # (1, R*out_dim)
    h1p = _round_up(w1a.shape[1], 128)
    opad = _round_up(w2.shape[1], 128)
    w1a = jnp.pad(w1a, ((0, 0), (0, h1p - w1a.shape[1])))
    w1i = jnp.pad(w1i, ((0, 0), (0, h1p - w1i.shape[1])))
    b1 = jnp.pad(b1, ((0, 0), (0, h1p - b1.shape[1])))
    w2 = jnp.pad(w2, ((0, h1p - w2.shape[0]), (0, opad - w2.shape[1])))
    b2 = jnp.pad(b2, ((0, 0), (0, opad - b2.shape[1])))

    fp = {
        "w_proj": w.astype(jnp.bfloat16), "b_proj": b.astype(jnp.float32),
        "w1a_bd": w1a.astype(jnp.bfloat16), "w1i_bd": w1i.astype(jnp.bfloat16),
        "b1": b1.astype(jnp.float32),
        "w2_bd": w2.astype(jnp.bfloat16), "b2": b2.astype(jnp.float32),
    }
    for name in ("ws1", "bs1", "ws2", "bs2"):
        if name in p:
            fp[name] = p[name]
    return fp


# ---------------------------------------------------------------------------
# Forward pass (mirrors Modular_Transformer.forward)
# ---------------------------------------------------------------------------

def modular_transformer_forward(fp, x, r_scores, *, num_heads, num_rules, op):
    bsz, n, dim = x.shape
    RH = num_rules * num_heads
    head_dim = fp["w1i_bd"].shape[0] // num_rules
    proj = RH * head_dim
    out_dim = dim if op else dim + 1
    M = bsz * n
    scaling = head_dim ** (-0.5)

    # --- fused q|k|v|in_ projection: one lane-dense padded output, split in XLA ------
    y = fused_projection(x.reshape(M, dim).astype(jnp.bfloat16),
                         fp["w_proj"], fp["b_proj"])              # (M, Npad) bf16
    q2 = y[:, 0 * proj:1 * proj]
    k2 = y[:, 1 * proj:2 * proj]
    v2 = y[:, 2 * proj:3 * proj]
    in2 = y[:, 3 * proj:3 * proj + num_rules * head_dim]

    # --- attention: head-batched, one grid step per batch element --------------------
    def to_heads(t):
        return t.reshape(bsz, n, RH, head_dim).transpose(0, 2, 1, 3)

    attn = attention_pallas(to_heads(q2), to_heads(k2), to_heads(v2), scale=scaling)
    # (bsz, RH, n, hd) -> rows (b, t) with rule-major features; matches torch's
    # .transpose(2,1).reshape(bsz*n, num_rules, head_dim*num_heads)
    attn2 = attn.transpose(0, 2, 1, 3).reshape(M, proj)

    # --- out_proj: block-diag GroupLinear -> ReLU -> GroupLinear, concat folded ------
    out2 = group_mlp_pallas(attn2, in2, fp["w1a_bd"], fp["w1i_bd"], fp["b1"],
                            fp["w2_bd"], fp["b2"])                # (M, Opad) f32
    out2 = out2[:, :num_rules * out_dim]

    if op:
        r_values = out2.reshape(bsz, n, num_rules, dim)
        # Tiny scorer MLP (R -> head_dim -> R): left to XLA fusion on purpose.
        s = jnp.maximum(jnp.dot(r_scores, fp["ws1"]) + fp["bs1"], 0.0)
        s = jnp.dot(s, fp["ws2"]) + fp["bs2"]
        r_sc = jax.nn.softmax(s, axis=-1)[..., None]              # (bsz, n, R, 1)
    else:
        o = out2.reshape(bsz, n, num_rules, dim + 1)
        r_values = o[..., :-1]
        r_sc = jax.nn.softmax(o[..., -1:], axis=2)

    y_out = jnp.sum(r_values * r_sc, axis=2)                      # (bsz, n, dim)
    return y_out, r_sc


# ---------------------------------------------------------------------------
# Pure-JAX f32 reference of the PyTorch forward (for the tolerance cross-check)
# ---------------------------------------------------------------------------

def reference_forward(p, x, r_scores, *, num_heads, num_rules, op):
    bsz, n, dim = x.shape
    head_dim = p["win"].shape[1] // num_rules
    RH = num_rules * num_heads
    scaling = head_dim ** (-0.5)

    q = (x @ p["wq"] + p["bq"]).reshape(bsz, n, RH, head_dim) * scaling
    k = (x @ p["wk"] + p["bk"]).reshape(bsz, n, RH, head_dim)
    v = (x @ p["wv"] + p["bv"]).reshape(bsz, n, RH, head_dim)
    q = q.transpose(0, 2, 1, 3)
    k = k.transpose(0, 2, 3, 1)
    v = v.transpose(0, 2, 1, 3)
    score = jnp.matmul(q, k)
    score = jnp.where(jnp.eye(n, dtype=bool)[None, None], -jnp.inf, score)
    score = jax.nn.softmax(score, axis=-1)
    out = jnp.matmul(score, v).transpose(0, 2, 1, 3).reshape(
        bsz * n, num_rules, head_dim * num_heads)
    in_ = (x @ p["win"] + p["bin"]).reshape(bsz * n, num_rules, head_dim)
    out = jnp.concatenate([out, in_], axis=-1)
    h = jnp.einsum("mrd,rde->mre", out, p["gw1"]) + p["gb1"][None]
    h = jnp.maximum(h, 0.0)
    o = jnp.einsum("mre,reo->mro", h, p["gw2"]) + p["gb2"][None]
    if op:
        r_values = o.reshape(bsz, n, num_rules, dim)
        s = jnp.maximum(r_scores @ p["ws1"] + p["bs1"], 0.0)
        s = s @ p["ws2"] + p["bs2"]
        r_sc = jax.nn.softmax(s, axis=-1)[..., None]
    else:
        o = o.reshape(bsz, n, num_rules, dim + 1)
        r_values = o[..., :-1]
        r_sc = jax.nn.softmax(o[..., -1:], axis=2)
    y = jnp.sum(r_values * r_sc, axis=2)
    return y, r_sc


# ---------------------------------------------------------------------------
# Demo
# ---------------------------------------------------------------------------

if __name__ == "__main__":
    dim, att_dim, num_heads, num_rules, op = 32, 32, 2, 2, True
    bsz, n = 2, 8

    key = jax.random.PRNGKey(0)
    kparam, kx, kr = jax.random.split(key, 3)
    raw = init_params(kparam, dim, att_dim, num_heads, num_rules, op)
    params = prepare_params(raw, num_heads=num_heads, num_rules=num_rules)
    x = jax.random.normal(kx, (bsz, n, dim), jnp.float32)
    r_scores = jax.random.normal(kr, (bsz, n, num_rules), jnp.float32)

    fwd = jax.jit(functools.partial(modular_transformer_forward,
                                    num_heads=num_heads, num_rules=num_rules, op=op))
    y, r_sc = fwd(params, x, r_scores)
    jax.block_until_ready((y, r_sc))

    # correctness cross-check against the f32 reference (bf16 operands -> loose tol)
    y_ref, r_ref = reference_forward(raw, x, r_scores, num_heads=num_heads,
                                     num_rules=num_rules, op=op)
    assert y.shape == (bsz, n, dim)
    assert r_sc.shape == (bsz, n, num_rules, 1)
    assert bool(jnp.all(jnp.isfinite(y)))
    y_err = float(jnp.max(jnp.abs(y.astype(jnp.float32) - y_ref)))
    r_err = float(jnp.max(jnp.abs(r_sc.astype(jnp.float32) - r_ref)))
    assert y_err < 8e-2, f"output mismatch vs reference: {y_err}"
    assert r_err < 1e-3, f"rule-score mismatch vs reference: {r_err}"
    print("KERNEL_OK")
</pallas_src>

<mosaic_0001>
module attributes {stable_mosaic.version = 11 : i64} {
  func.func @_proj_kernel(%arg0: i32, %arg1: i32, %arg2: memref<16x32xbf16, #tpu.memory_space<vmem>>, %arg3: memref<32x128xbf16, #tpu.memory_space<vmem>>, %arg4: memref<1x128xf32, #tpu.memory_space<vmem>>, %arg5: memref<16x128xbf16, #tpu.memory_space<vmem>>, %arg6: memref<16x128xf32, #tpu.memory_space<vmem>>) attributes {dimension_semantics = [#tpu.dimension_semantics<parallel>, #tpu.dimension_semantics<arbitrary>], iteration_bounds = array<i64: 1, 1>, scalar_prefetch = 0 : i64, scratch_operands = 1 : i64, tpu.core_type = #tpu.core_type<tc>, window_params = [{transform_indices = @transform_0, window_bounds = array<i64: 16, 32>}, {transform_indices = @transform_1, window_bounds = array<i64: 32, 128>}, {pipeline_mode = #tpu.pipeline_mode<synchronous>, transform_indices = @transform_2, window_bounds = array<i64: 1, 128>}, {transform_indices = @transform_3, window_bounds = array<i64: 16, 128>}]} {
    %c0_i32 = arith.constant 0 : i32
    %0 = arith.cmpi eq, %arg1, %c0_i32 : i32
    %1 = arith.extui %0 : i1 to i32
    %c0_i32_0 = arith.constant 0 : i32
    %2 = arith.cmpi ne, %1, %c0_i32_0 : i32
    scf.if %2 {
      %cst_10 = arith.constant 0.000000e+00 : f32
      %12 = vector.broadcast %cst_10 : f32 to vector<16x128xf32>
      %c0_11 = arith.constant 0 : index
      %c0_12 = arith.constant 0 : index
      %13 = vector.load %arg6[%c0_11, %c0_12] : memref<16x128xf32, #tpu.memory_space<vmem>>, vector<16x128xf32>
      tpu.vector_store %arg6[%c0_11, %c0_12], %12 {strides = array<i32>} : memref<16x128xf32, #tpu.memory_space<vmem>>, vector<16x128xf32>,
    } else {
    }
    %c0 = arith.constant 0 : index
    %c0_1 = arith.constant 0 : index
    %3 = vector.load %arg6[%c0, %c0_1] : memref<16x128xf32, #tpu.memory_space<vmem>>, vector<16x128xf32>
    %c0_2 = arith.constant 0 : index
    %c0_3 = arith.constant 0 : index
    %4 = vector.load %arg2[%c0_2, %c0_3] : memref<16x32xbf16, #tpu.memory_space<vmem>>, vector<16x32xbf16>
    %c0_4 = arith.constant 0 : index
    %c0_5 = arith.constant 0 : index
    %5 = vector.load %arg3[%c0_4, %c0_5] : memref<32x128xbf16, #tpu.memory_space<vmem>>, vector<32x128xbf16>
    %cst = arith.constant dense<0.000000e+00> : vector<16x128xf32>
    %6 = tpu.matmul %4, %5, %cst {dimension_numbers = #tpu.dot_dimension_numbers<[1], [0], [0], [1], [0, 0, 1, 1], [], []>} : vector<16x32xbf16>, vector<32x128xbf16>, vector<16x128xf32> -> vector<16x128xf32>
    %7 = arith.addf %3, %6 : vector<16x128xf32>
    %c0_6 = arith.constant 0 : index
    %c0_7 = arith.constant 0 : index
    %8 = vector.load %arg6[%c0_6, %c0_7] : memref<16x128xf32, #tpu.memory_space<vmem>>, vector<16x128xf32>
    tpu.vector_store %arg6[%c0_6, %c0_7], %7 {strides = array<i32>} : memref<16x128xf32, #tpu.memory_space<vmem>>, vector<16x128xf32>,
    %c0_i32_8 = arith.constant 0 : i32
    %9 = arith.cmpi eq, %arg1, %c0_i32_8 : i32
    %10 = arith.extui %9 : i1 to i32
    %c0_i32_9 = arith.constant 0 : i32
    %11 = arith.cmpi ne, %10, %c0_i32_9 : i32
    scf.if %11 {
      %c0_10 = arith.constant 0 : index
      %c0_11 = arith.constant 0 : index
      %12 = vector.load %arg6[%c0_10, %c0_11] : memref<16x128xf32, #tpu.memory_space<vmem>>, vector<16x128xf32>
      %c0_12 = arith.constant 0 : index
      %c0_13 = arith.constant 0 : index
      %13 = vector.load %arg4[%c0_12, %c0_13] : memref<1x128xf32, #tpu.memory_space<vmem>>, vector<1x128xf32>
      %14 = vector.broadcast %13 : vector<1x128xf32> to vector<16x128xf32>
      %15 = arith.addf %12, %14 : vector<16x128xf32>
      %16 = arith.truncf %15 : vector<16x128xf32> to vector<16x128xbf16>
      %c0_14 = arith.constant 0 : index
      %c0_15 = arith.constant 0 : index
      %17 = vector.load %arg5[%c0_14, %c0_15] : memref<16x128xbf16, #tpu.memory_space<vmem>>, vector<16x128xbf16>
      tpu.vector_store %arg5[%c0_14, %c0_15], %16 {strides = array<i32>} : memref<16x128xbf16, #tpu.memory_space<vmem>>, vector<16x128xbf16>,
    } else {
    }
    return
  }
  func.func @transform_0(%arg0: i32, %arg1: i32) -> (i32, i32) {
    %c0_i32 = arith.constant 0 : i32
    return %arg0, %arg1 : i32, i32
  }
  func.func @transform_1(%arg0: i32, %arg1: i32) -> (i32, i32) {
    %c0_i32 = arith.constant 0 : i32
    %c0_i32_0 = arith.constant 0 : i32
    return %arg1, %c0_i32 : i32, i32
  }
  func.func @transform_2(%arg0: i32, %arg1: i32) -> (i32, i32) {
    %c0_i32 = arith.constant 0 : i32
    %c0_i32_0 = arith.constant 0 : i32
    %c0_i32_1 = arith.constant 0 : i32
    return %c0_i32, %c0_i32_0 : i32, i32
  }
  func.func @transform_3(%arg0: i32, %arg1: i32) -> (i32, i32) {
    %c0_i32 = arith.constant 0 : i32
    %c0_i32_0 = arith.constant 0 : i32
    return %arg0, %c0_i32 : i32, i32
  }
}

module attributes {stable_mosaic.version = 11 : i64} {
  func.func @_attn_kernel(%arg0: i32, %arg1: memref<1x4x8x8xbf16, #tpu.memory_space<vmem>>, %arg2: memref<1x4x8x8xbf16, #tpu.memory_space<vmem>>, %arg3: memref<1x4x8x8xbf16, #tpu.memory_space<vmem>>, %arg4: memref<1x4x8x8xbf16, #tpu.memory_space<vmem>>) attributes {dimension_semantics = [#tpu.dimension_semantics<parallel>], iteration_bounds = array<i64: 2>, scalar_prefetch = 0 : i64, scratch_operands = 0 : i64, tpu.core_type = #tpu.core_type<tc>, window_params = [{transform_indices = @transform_0, window_bounds = array<i64: 1, 4, 8, 8>}, {transform_indices = @transform_1, window_bounds = array<i64: 1, 4, 8, 8>}, {transform_indices = @transform_2, window_bounds = array<i64: 1, 4, 8, 8>}, {transform_indices = @transform_3, window_bounds = array<i64: 1, 4, 8, 8>}]} {
    %c0 = arith.constant 0 : index
    %c0_0 = arith.constant 0 : index
    %c0_1 = arith.constant 0 : index
    %c0_2 = arith.constant 0 : index
    %0 = vector.load %arg1[%c0, %c0_0, %c0_1, %c0_2] : memref<1x4x8x8xbf16, #tpu.memory_space<vmem>>, vector<1x4x8x8xbf16>
    %1 = vector.shape_cast %0 : vector<1x4x8x8xbf16> to vector<4x8x8xbf16>
    %c0_3 = arith.constant 0 : index
    %c0_4 = arith.constant 0 : index
    %c0_5 = arith.constant 0 : index
    %c0_6 = arith.constant 0 : index
    %2 = vector.load %arg2[%c0_3, %c0_4, %c0_5, %c0_6] : memref<1x4x8x8xbf16, #tpu.memory_space<vmem>>, vector<1x4x8x8xbf16>
    %3 = vector.shape_cast %2 : vector<1x4x8x8xbf16> to vector<4x8x8xbf16>
    %c0_7 = arith.constant 0 : index
    %c0_8 = arith.constant 0 : index
    %c0_9 = arith.constant 0 : index
    %c0_10 = arith.constant 0 : index
    %4 = vector.load %arg3[%c0_7, %c0_8, %c0_9, %c0_10] : memref<1x4x8x8xbf16, #tpu.memory_space<vmem>>, vector<1x4x8x8xbf16>
    %5 = vector.shape_cast %4 : vector<1x4x8x8xbf16> to vector<4x8x8xbf16>
    "tpu.trace_start"() <{level = 10 : i32, message = "hqd,hkd->hqk"}> : () -> ()
    %cst = arith.constant dense<0.000000e+00> : vector<4x8x8xf32>
    %6 = tpu.matmul %1, %3, %cst {dimension_numbers = #tpu.dot_dimension_numbers<[2], [2], [1], [1], [0, 0, 0, 1, 1, 1], [0], [0]>} : vector<4x8x8xbf16>, vector<4x8x8xbf16>, vector<4x8x8xf32> -> vector<4x8x8xf32>
    "tpu.trace_stop"() : () -> ()
    %cst_11 = arith.constant 0.353553385 : f32
    %7 = vector.broadcast %cst_11 : f32 to vector<4x8x8xf32>
    %8 = arith.mulf %6, %7 : vector<4x8x8xf32>
    %9 = tpu.iota {dimensions = array<i32: 0>} : vector<8x8xi32>
    %10 = tpu.iota {dimensions = array<i32: 1>} : vector<8x8xi32>
    %11 = arith.cmpi eq, %9, %10 : vector<8x8xi32>
    %cst_12 = arith.constant 0xFF800000 : f32
    %cst_13 = arith.constant 0.000000e+00 : f32
    %12 = vector.broadcast %cst_12 : f32 to vector<8x8xf32>
    %13 = vector.broadcast %cst_13 : f32 to vector<8x8xf32>
    %14 = arith.select %11, %12, %13 : vector<8x8xi1>, vector<8x8xf32>
    %15 = vector.shape_cast %14 : vector<8x8xf32> to vector<1x8x8xf32>
    %16 = vector.broadcast %15 : vector<1x8x8xf32> to vector<4x8x8xf32>
    %17 = arith.addf %8, %16 : vector<4x8x8xf32>
    %cst_14 = arith.constant dense<0xFF800000> : vector<4x8xf32>
    %18 = vector.multi_reduction <maximumf>, %17, %cst_14 [2] : vector<4x8x8xf32> to vector<4x8xf32>
    %19 = vector.shape_cast %18 : vector<4x8xf32> to vector<4x8x1xf32>
    %20 = vector.broadcast %19 : vector<4x8x1xf32> to vector<4x8x8xf32>
    %21 = arith.subf %17, %20 : vector<4x8x8xf32>
    %22 = math.exp %21 : vector<4x8x8xf32>
    %cst_15 = arith.constant dense<0.000000e+00> : vector<4x8xf32>
    %23 = vector.multi_reduction <add>, %22, %cst_15 [2] : vector<4x8x8xf32> to vector<4x8xf32>
    %24 = vector.shape_cast %23 : vector<4x8xf32> to vector<4x8x1xf32>
    %25 = tpu.reciprocal %24 {approx = true} : vector<4x8x1xf32> -> vector<4x8x1xf32>
    %26 = vector.broadcast %25 : vector<4x8x1xf32> to vector<4x8x8xf32>
    %27 = arith.mulf %22, %26 : vector<4x8x8xf32>
    %28 = arith.truncf %27 : vector<4x8x8xf32> to vector<4x8x8xbf16>
    "tpu.trace_start"() <{level = 10 : i32, message = "hqk,hkd->hqd"}> : () -> ()
    %cst_16 = arith.constant dense<0.000000e+00> : vector<4x8x8xf32>
    %29 = tpu.matmul %28, %5, %cst_16 {dimension_numbers = #tpu.dot_dimension_numbers<[2], [1], [1], [2], [0, 0, 0, 1, 1, 2], [0], [0]>} : vector<4x8x8xbf16>, vector<4x8x8xbf16>, vector<4x8x8xf32> -> vector<4x8x8xf32>
    "tpu.trace_stop"() : () -> ()
    %30 = arith.truncf %29 : vector<4x8x8xf32> to vector<4x8x8xbf16>
    %c0_17 = arith.constant 0 : index
    %c0_18 = arith.constant 0 : index
    %c0_19 = arith.constant 0 : index
    %c0_20 = arith.constant 0 : index
    %31 = vector.load %arg4[%c0_17, %c0_18, %c0_19, %c0_20] : memref<1x4x8x8xbf16, #tpu.memory_space<vmem>>, vector<1x4x8x8xbf16>
    %32 = vector.shape_cast %31 : vector<1x4x8x8xbf16> to vector<4x8x8xbf16>
    %33 = vector.shape_cast %30 : vector<4x8x8xbf16> to vector<1x4x8x8xbf16>
    tpu.vector_store %arg4[%c0_17, %c0_18, %c0_19, %c0_20], %33 {strides = array<i32>} : memref<1x4x8x8xbf16, #tpu.memory_space<vmem>>, vector<1x4x8x8xbf16>,
    return
  }
  func.func @transform_0(%arg0: i32) -> (i32, i32, i32, i32) {
    %c0_i32 = arith.constant 0 : i32
    %c0_i32_0 = arith.constant 0 : i32
    %c0_i32_1 = arith.constant 0 : i32
    %c0_i32_2 = arith.constant 0 : i32
    return %arg0, %c0_i32, %c0_i32_0, %c0_i32_1 : i32, i32, i32, i32
  }
  func.func @transform_1(%arg0: i32) -> (i32, i32, i32, i32) {
    %c0_i32 = arith.constant 0 : i32
    %c0_i32_0 = arith.constant 0 : i32
    %c0_i32_1 = arith.constant 0 : i32
    %c0_i32_2 = arith.constant 0 : i32
    return %arg0, %c0_i32, %c0_i32_0, %c0_i32_1 : i32, i32, i32, i32
  }
  func.func @transform_2(%arg0: i32) -> (i32, i32, i32, i32) {
    %c0_i32 = arith.constant 0 : i32
    %c0_i32_0 = arith.constant 0 : i32
    %c0_i32_1 = arith.constant 0 : i32
    %c0_i32_2 = arith.constant 0 : i32
    return %arg0, %c0_i32, %c0_i32_0, %c0_i32_1 : i32, i32, i32, i32
  }
  func.func @transform_3(%arg0: i32) -> (i32, i32, i32, i32) {
    %c0_i32 = arith.constant 0 : i32
    %c0_i32_0 = arith.constant 0 : i32
    %c0_i32_1 = arith.constant 0 : i32
    %c0_i32_2 = arith.constant 0 : i32
    return %arg0, %c0_i32, %c0_i32_0, %c0_i32_1 : i32, i32, i32, i32
  }
}

module attributes {stable_mosaic.version = 11 : i64} {
  func.func @_group_mlp_kernel(%arg0: i32, %arg1: memref<16x32xbf16, #tpu.memory_space<vmem>>, %arg2: memref<16x16xbf16, #tpu.memory_space<vmem>>, %arg3: memref<32x128xbf16, #tpu.memory_space<vmem>>, %arg4: memref<16x128xbf16, #tpu.memory_space<vmem>>, %arg5: memref<1x128xf32, #tpu.memory_space<vmem>>, %arg6: memref<128x128xbf16, #tpu.memory_space<vmem>>, %arg7: memref<1x128xf32, #tpu.memory_space<vmem>>, %arg8: memref<16x128xf32, #tpu.memory_space<vmem>>) attributes {dimension_semantics = [#tpu.dimension_semantics<parallel>], iteration_bounds = array<i64: 1>, scalar_prefetch = 0 : i64, scratch_operands = 0 : i64, tpu.core_type = #tpu.core_type<tc>, window_params = [{transform_indices = @transform_0, window_bounds = array<i64: 16, 32>}, {transform_indices = @transform_1, window_bounds = array<i64: 16, 16>}, {pipeline_mode = #tpu.pipeline_mode<synchronous>, transform_indices = @transform_2, window_bounds = array<i64: 32, 128>}, {pipeline_mode = #tpu.pipeline_mode<synchronous>, transform_indices = @transform_3, window_bounds = array<i64: 16, 128>}, {pipeline_mode = #tpu.pipeline_mode<synchronous>, transform_indices = @transform_4, window_bounds = array<i64: 1, 128>}, {pipeline_mode = #tpu.pipeline_mode<synchronous>, transform_indices = @transform_5, window_bounds = array<i64: 128, 128>}, {pipeline_mode = #tpu.pipeline_mode<synchronous>, transform_indices = @transform_6, window_bounds = array<i64: 1, 128>}, {transform_indices = @transform_7, window_bounds = array<i64: 16, 128>}]} {
    %c0 = arith.constant 0 : index
    %c0_0 = arith.constant 0 : index
    %0 = vector.load %arg1[%c0, %c0_0] : memref<16x32xbf16, #tpu.memory_space<vmem>>, vector<16x32xbf16>
    %c0_1 = arith.constant 0 : index
    %c0_2 = arith.constant 0 : index
    %1 = vector.load %arg3[%c0_1, %c0_2] : memref<32x128xbf16, #tpu.memory_space<vmem>>, vector<32x128xbf16>
    %cst = arith.constant dense<0.000000e+00> : vector<16x128xf32>
    %2 = tpu.matmul %0, %1, %cst {dimension_numbers = #tpu.dot_dimension_numbers<[1], [0], [0], [1], [0, 0, 1, 1], [], []>} : vector<16x32xbf16>, vector<32x128xbf16>, vector<16x128xf32> -> vector<16x128xf32>
    %c0_3 = arith.constant 0 : index
    %c0_4 = arith.constant 0 : index
    %3 = vector.load %arg2[%c0_3, %c0_4] : memref<16x16xbf16, #tpu.memory_space<vmem>>, vector<16x16xbf16>
    %c0_5 = arith.constant 0 : index
    %c0_6 = arith.constant 0 : index
    %4 = vector.load %arg4[%c0_5, %c0_6] : memref<16x128xbf16, #tpu.memory_space<vmem>>, vector<16x128xbf16>
    %cst_7 = arith.constant dense<0.000000e+00> : vector<16x128xf32>
    %5 = tpu.matmul %3, %4, %cst_7 {dimension_numbers = #tpu.dot_dimension_numbers<[1], [0], [0], [1], [0, 0, 1, 1], [], []>} : vector<16x16xbf16>, vector<16x128xbf16>, vector<16x128xf32> -> vector<16x128xf32>
    %6 = arith.addf %2, %5 : vector<16x128xf32>
    %c0_8 = arith.constant 0 : index
    %c0_9 = arith.constant 0 : index
    %7 = vector.load %arg5[%c0_8, %c0_9] : memref<1x128xf32, #tpu.memory_space<vmem>>, vector<1x128xf32>
    %8 = vector.broadcast %7 : vector<1x128xf32> to vector<16x128xf32>
    %9 = arith.addf %6, %8 : vector<16x128xf32>
    %cst_10 = arith.constant 0.000000e+00 : f32
    %10 = vector.broadcast %cst_10 : f32 to vector<16x128xf32>
    %11 = arith.maximumf %9, %10 : vector<16x128xf32>
    %12 = arith.truncf %11 : vector<16x128xf32> to vector<16x128xbf16>
    %c0_11 = arith.constant 0 : index
    %c0_12 = arith.constant 0 : index
    %13 = vector.load %arg6[%c0_11, %c0_12] : memref<128x128xbf16, #tpu.memory_space<vmem>>, vector<128x128xbf16>
    %cst_13 = arith.constant dense<0.000000e+00> : vector<16x128xf32>
    %14 = tpu.matmul %12, %13, %cst_13 {dimension_numbers = #tpu.dot_dimension_numbers<[1], [0], [0], [1], [0, 0, 1, 1], [], []>} : vector<16x128xbf16>, vector<128x128xbf16>, vector<16x128xf32> -> vector<16x128xf32>
    %c0_14 = arith.constant 0 : index
    %c0_15 = arith.constant 0 : index
    %15 = vector.load %arg7[%c0_14, %c0_15] : memref<1x128xf32, #tpu.memory_space<vmem>>, vector<1x128xf32>
    %16 = vector.broadcast %15 : vector<1x128xf32> to vector<16x128xf32>
    %17 = arith.addf %14, %16 : vector<16x128xf32>
    %c0_16 = arith.constant 0 : index
    %c0_17 = arith.constant 0 : index
    %18 = vector.load %arg8[%c0_16, %c0_17] : memref<16x128xf32, #tpu.memory_space<vmem>>, vector<16x128xf32>
    tpu.vector_store %arg8[%c0_16, %c0_17], %17 {strides = array<i32>} : memref<16x128xf32, #tpu.memory_space<vmem>>, vector<16x128xf32>,
    return
  }
  func.func @transform_0(%arg0: i32) -> (i32, i32) {
    %c0_i32 = arith.constant 0 : i32
    %c0_i32_0 = arith.constant 0 : i32
    return %arg0, %c0_i32 : i32, i32
  }
  func.func @transform_1(%arg0: i32) -> (i32, i32) {
    %c0_i32 = arith.constant 0 : i32
    %c0_i32_0 = arith.constant 0 : i32
    return %arg0, %c0_i32 : i32, i32
  }
  func.func @transform_2(%arg0: i32) -> (i32, i32) {
    %c0_i32 = arith.constant 0 : i32
    %c0_i32_0 = arith.constant 0 : i32
    %c0_i32_1 = arith.constant 0 : i32
    return %c0_i32, %c0_i32_0 : i32, i32
  }
  func.func @transform_3(%arg0: i32) -> (i32, i32) {
    %c0_i32 = arith.constant 0 : i32
    %c0_i32_0 = arith.constant 0 : i32
    %c0_i32_1 = arith.constant 0 : i32
    return %c0_i32, %c0_i32_0 : i32, i32
  }
  func.func @transform_4(%arg0: i32) -> (i32, i32) {
    %c0_i32 = arith.constant 0 : i32
    %c0_i32_0 = arith.constant 0 : i32
    %c0_i32_1 = arith.constant 0 : i32
    return %c0_i32, %c0_i32_0 : i32, i32
  }
  func.func @transform_5(%arg0: i32) -> (i32, i32) {
    %c0_i32 = arith.constant 0 : i32
    %c0_i32_0 = arith.constant 0 : i32
    %c0_i32_1 = arith.constant 0 : i32
    return %c0_i32, %c0_i32_0 : i32, i32
  }
  func.func @transform_6(%arg0: i32) -> (i32, i32) {
    %c0_i32 = arith.constant 0 : i32
    %c0_i32_0 = arith.constant 0 : i32
    %c0_i32_1 = arith.constant 0 : i32
    return %c0_i32, %c0_i32_0 : i32, i32
  }
  func.func @transform_7(%arg0: i32) -> (i32, i32) {
    %c0_i32 = arith.constant 0 : i32
    %c0_i32_0 = arith.constant 0 : i32
    return %arg0, %c0_i32 : i32, i32
  }
}

</mosaic_0001>

<llo_original>
// kernel: modular_transformer_forward.3
$region0: #{modular_transformer_forward.3}
  #allocation0 [shape = 'u32[]', space=smem, size = 0x4, offset = 0x4, fixed_abs, tag = 'smem constant byte address 0x4 - core index']
  #allocation1 [shape = 'u32[144,128]{1,0:T(1,128)}', space=vmem, size = 0x12000, scoped, tag = 'internal scratch']
  #allocation2 [shape = 'f32[16,128]{1,0:T(8,128)}', space=vmem, size = 0x2000, scoped, tag = 'scratch operand']
  %s0 = inlined_call_operand.vmem [shape: bf16[16,32], index: 0, kind: input, shape index: {}]
  %s1 = inlined_call_operand.vmem [shape: bf16[32,128], index: 1, kind: input, shape index: {}]
  %s2 = inlined_call_operand.vmem [shape: f32[1,128], index: 2, kind: input, shape index: {}]
  %s3 = inlined_call_operand.vmem [shape: bf16[16,128], index: 3, kind: output, shape index: {}]
  %s4 = sld [smem:[#allocation0]]
  $region30: #{modular_transformer_forward.3} parent=0
    _
  %s6 = ssub.s32 1, %s4
  %s7 = scalar_select 0, %s6, %s4
  // Predicated region
  $region2: #{modular_transformer_forward.3} parent=0 // pred_check
    _
  $region3: #{modular_transformer_forward.3} parent=0 // pred_check_branch
    %9 = sbr.rel (0) target = $region5
  $region4: #{modular_transformer_forward.3} parent=0 // pred_region
    _
  $region5: #{modular_transformer_forward.3} parent=0 // pred_fallthru
    _
  // Predicated region
  $region6: #{modular_transformer_forward.3} parent=0 // pred_check
    _
  $region7: #{modular_transformer_forward.3} parent=0 // pred_check_branch
    %11 = sbr.rel (0) target = $region9
  $region8: #{modular_transformer_forward.3} parent=0 // pred_region
    _
  $region9: #{modular_transformer_forward.3} parent=0 // pred_fallthru
    _
  // Predicated region
  $region10: #{modular_transformer_forward.3} parent=0 // pred_check
    _
  $region11: #{modular_transformer_forward.3} parent=0 // pred_check_branch
    %13 = sbr.rel (0) target = $region13
  $region12: #{modular_transformer_forward.3} parent=0 // pred_region
    _
  $region13: #{modular_transformer_forward.3} parent=0 // pred_fallthru
    _
  %p15 = scmp.eq.s32.totalorder 0, 0
  // Predicated region
  $region14: #{modular_transformer_forward.3} parent=0 // pred_check
    %p16 = pneg %p15
  $region15: #{modular_transformer_forward.3} parent=0 // pred_check_branch
    %18 = sbr.rel (%p16) target = $region17
  $region16: #{modular_transformer_forward.3} parent=0 // pred_region
    %19 = vst [vmem:[#allocation2] sm:$0xff] 0.0
    %20 = vst [vmem:[#allocation2 + $0x8] sm:$0xff] 0.0
  $region17: #{modular_transformer_forward.3} parent=0 // pred_fallthru
    _
  %v21 = vld [vmem:[#allocation2] sm:$0xff]
  %v22 = vld [vmem:[#allocation2 + $0x8] sm:$0xff]
  %v23 = vld [vmem:[%s0] sm:$0xf]
  %v24 = vld [vmem:[%s0 + $0x4] sm:$0xf]
  %v25 = vld [vmem:[%s1] sm:$0xf]
  %v26 = vld [vmem:[%s1 + $0x4] sm:$0xf]
  %v27 = vld [vmem:[%s1 + $0x8] sm:$0xf]
  %v28 = vld [vmem:[%s1 + $0xc] sm:$0xf]
  %v31 = vunpack.c.l.b16 %v23
  %v32 = vunpack.c.l.b16 %v24
  %v33 = vpack.c.b16 %v32, %v31
  %v38 = vunpack.c.l.b16 %v25
  %v39 = vunpack.c.l.b16 %v26
  %v40 = vunpack.c.l.b16 %v27
  %v41 = vunpack.c.l.b16 %v28
  %v42 = vpack.c.b16 %v39, %v38
  %v43 = vpack.c.b16 %v41, %v40
  %vm46 = vcmask 261120
  %v48 = vsel %vm46, %v33, 0
  %50 = vmatprep.subr.bf16.mxu0 0
  %51 = vmatpush1.bf16.msra.mxu0 %v42
  %52 = vmatprep.subr.bf16.mxu0 0
  %53 = vmatpush1.bf16.msra.mxu0 %v43
  %54 = vmatprep.subr.bf16.mxu0 0
  %55 = vmatpush1.bf16.msra.mxu0 0
  %56 = vmatprep.subr.bf16.mxu0 0
  %57 = vmatpush1.bf16.msra.mxu0 0
  %58 = vmatprep.subr.bf16.mxu0 0
  %59 = vmatpush1.bf16.msra.mxu0 0
  %60 = vmatprep.subr.bf16.mxu0 0
  %61 = vmatpush1.bf16.msra.mxu0 0
  %62 = vmatprep.subr.bf16.mxu0 0
  %63 = vmatpush1.bf16.msra.mxu0 0
  %64 = vmatprep.subr.bf16.mxu0 0
  %65 = vmatpush1.bf16.msra.mxu0 0
  %66 = vmatprep.subr.bf16.mxu0 0
  %67 = vmatpush1.bf16.msra.mxu0 0
  %68 = vmatprep.subr.bf16.mxu0 0
  %69 = vmatpush1.bf16.msra.mxu0 0
  %70 = vmatprep.subr.bf16.mxu0 0
  %71 = vmatpush1.bf16.msra.mxu0 0
  %72 = vmatprep.subr.bf16.mxu0 0
  %73 = vmatpush1.bf16.msra.mxu0 0
  %74 = vmatprep.subr.bf16.mxu0 0
  %75 = vmatpush1.bf16.msra.mxu0 0
  %76 = vmatprep.subr.bf16.mxu0 0
  %77 = vmatpush1.bf16.msra.mxu0 0
  %78 = vmatprep.subr.bf16.mxu0 0
  %79 = vmatpush1.bf16.msra.mxu0 0
  %80 = vmatprep.subr.bf16.mxu0 0
  %81 = vmatpush1.bf16.msra.mxu0 0
  %82 = vmatprep.mubr.bf16.mxu0 0
  %83 = vmatmul.mubr.bf16.gmra.mrb[0].mxu0 %v48
  %v84 = vpop.f32.mrb[0].mxu0
  %v85 = vadd.f32 0.0, %v84
  %v86 = vpop.f32.mrb[0].mxu0
  %v87 = vpop.f32.mrb[0].mxu0
  %v88 = vadd.f32 0.0, %v87
  %v89 = vpop.f32.mrb[0].mxu0
  %90 = vdwg.mxu0
  %v91 = vadd.f32 %v21, %v85
  %v92 = vadd.f32 %v22, %v88
  %93 = vst [vmem:[#allocation2] sm:$0xff] %v91
  %94 = vst [vmem:[#allocation2 + $0x8] sm:$0xff] %v92
  // Predicated region
  $region18: #{modular_transformer_forward.3} parent=0 // pred_check
    %p95 = pneg %p15
  $region19: #{modular_transformer_forward.3} parent=0 // pred_check_branch
    %97 = sbr.rel (%p95) target = $region21
  $region20: #{modular_transformer_forward.3} parent=0 // pred_region
    %v98 = vld [vmem:[#allocation2] sm:$0xff]
    %v99 = vld [vmem:[#allocation2 + $0x8] sm:$0xff]
    %v100 = vld [vmem:[%s2] sm:$0x1]
    %v102 = vlaneseq
    %v103 = vshrl.u32 %v102, 7
    %v104 = vsub.s32 0, %v103
    %v105 = vrot.slane %v100, %v104
    %v107 = vadd.f32 %v98, %v105
    %v108 = vadd.f32 %v99, %v105
    %v109 = vpack.c.bf16 %v108, %v107
    %v111 = vunpack.c.l.b16 %v109
    %v112 = vunpack.c.h.b16 %v109
    %v113 = vpack.c.b16 %v111, %v111
    %v114 = vpack.c.b16 %v112, %v112
    %117 = vst [vmem:[%s3] sm:$0xf] %v113
    %118 = vst [vmem:[%s3 + $0x4] sm:$0xf] %v114
  $region21: #{modular_transformer_forward.3} parent=0 // pred_fallthru
    _
  // Predicated region
  $region22: #{modular_transformer_forward.3} parent=0 // pred_check
    _
  $region23: #{modular_transformer_forward.3} parent=0 // pred_check_branch
    %120 = sbr.rel (0) target = $region25
  $region24: #{modular_transformer_forward.3} parent=0 // pred_region
    _
  $region25: #{modular_transformer_forward.3} parent=0 // pred_fallthru
    _
  // Predicated region
  $region26: #{modular_transformer_forward.3} parent=0 // pred_check
    _
  $region27: #{modular_transformer_forward.3} parent=0 // pred_check_branch
    %122 = sbr.rel (0) target = $region29
  $region28: #{modular_transformer_forward.3} parent=0 // pred_region
    _
  $region29: #{modular_transformer_forward.3} parent=0 // pred_fallthru
    _

// kernel: modular_transformer_forward.4
$region0: #{modular_transformer_forward.4}
  #allocation0 [shape = 'u32[]', space=smem, size = 0x4, offset = 0x4, fixed_abs, tag = 'smem constant byte address 0x4 - core index']
  #allocation1 [shape = 'u32[144,128]{1,0:T(1,128)}', space=vmem, size = 0x12000, scoped, tag = 'internal scratch']
  %s0 = inlined_call_operand.vmem [shape: bf16[2,4,8,8], index: 0, kind: input, shape index: {}]
  %s1 = inlined_call_operand.vmem [shape: bf16[2,4,8,8], index: 1, kind: input, shape index: {}]
  %s2 = inlined_call_operand.vmem [shape: bf16[2,4,8,8], index: 2, kind: input, shape index: {}]
  %s3 = inlined_call_operand.vmem [shape: bf16[2,4,8,8], index: 3, kind: output, shape index: {}]
  %s4 = sld [smem:[#allocation0]]
  $region45: #{modular_transformer_forward.4} parent=0
    _
  %s6 = ssub.s32 1, %s4
  %s7 = scalar_select 0, %s6, %s4
  loop: start=0, step=1, limit=4
  $region2: #{modular_transformer_forward.4} parent=0 // loop_pre_header
    _
  $region3: #{modular_transformer_forward.4} parent=0 // loop_header
    %s9 = sphi 0, %s13
    %p10 = scmp.ge.s32.totalorder %s9, 4
    %s19 = sphi 0, %s21
    %s22 = sphi 0, %s19
    %s23 = sphi 0, %s22
    %s39 = sphi 0, %s23
    %s45 = sphi 0, %s47
    %s48 = sphi 0, %s45
    %s49 = sphi 0, %s48
    %s65 = sphi 0, %s49
    %s71 = sphi 0, %s73
    %s74 = sphi 0, %s71
    %s75 = sphi 0, %s74
    %s91 = sphi 0, %s75
    %s97 = sphi 0, %s99
    %s100 = sphi 0, %s97
    %s101 = sphi 0, %s100
    %s117 = sphi 0, %s101
  $region4: #{modular_transformer_forward.4} parent=0 // loop_header_branch
    %12 = sbr.rel (%p10) target = $region8
  $region5: #{modular_transformer_forward.4} parent=0 // loop_body
    %s14 = ssub.s32 %s9, 1
    %s15 = ssub.s32 %s9, 2
    %s16 = sadd.s32 %s9, 1
    %s17 = ssub.s32 %s9, %s16
    %p18 = scmp.eq.s32.totalorder %s17, 0
    %s20 = sadd.s32 %s19, 1
    %s21 = scalar_select %p18, %s19, %s20
    %p24 = pneg %p18
    %p25 = scmp.eq.s32.totalorder %s9, 1
    %p26 = por %p24, %p25
    %p27 = scmp.ne.s32.totalorder %s19, %s22
    %p28 = scmp.eq.s32.totalorder %s9, 0
    %p29 = por %p27, %p28
    %p30 = scmp.ne.s32.totalorder %s19, %s22
    %p31 = scmp.eq.s32.totalorder %s14, 1
    %p32 = por %p30, %p31
    %p33 = scmp.ne.s32.totalorder %s22, %s23
    %p34 = scmp.eq.s32.totalorder %s14, 0
    %p35 = por %p33, %p34
    %p36 = scmp.ne.s32.totalorder %s22, %s23
    %p37 = scmp.eq.s32.totalorder %s15, 1
    %p38 = por %p36, %p37
    %p40 = scmp.ne.s32.totalorder %s23, %s39
    %p41 = scmp.eq.s32.totalorder %s15, 0
    %p42 = por %p40, %p41
    %s43 = ssub.s32 %s9, %s16
    %p44 = scmp.eq.s32.totalorder %s43, 0
    %s46 = sadd.s32 %s45, 1
    %s47 = scalar_select %p44, %s45, %s46
    %p50 = pneg %p44
    %p51 = scmp.eq.s32.totalorder %s9, 1
    %p52 = por %p50, %p51
    %p53 = scmp.ne.s32.totalorder %s45, %s48
    %p54 = scmp.eq.s32.totalorder %s9, 0
    %p55 = por %p53, %p54
    %p56 = scmp.ne.s32.totalorder %s45, %s48
    %p57 = scmp.eq.s32.totalorder %s14, 1
    %p58 = por %p56, %p57
    %p59 = scmp.ne.s32.totalorder %s48, %s49
    %p60 = scmp.eq.s32.totalorder %s14, 0
    %p61 = por %p59, %p60
    %p62 = scmp.ne.s32.totalorder %s48, %s49
    %p63 = scmp.eq.s32.totalorder %s15, 1
    %p64 = por %p62, %p63
    %p66 = scmp.ne.s32.totalorder %s49, %s65
    %p67 = scmp.eq.s32.totalorder %s15, 0
    %p68 = por %p66, %p67
    %s69 = ssub.s32 %s9, %s16
    %p70 = scmp.eq.s32.totalorder %s69, 0
    %s72 = sadd.s32 %s71, 1
    %s73 = scalar_select %p70, %s71, %s72
    %p76 = pneg %p70
    %p77 = scmp.eq.s32.totalorder %s9, 1
    %p78 = por %p76, %p77
    %p79 = scmp.ne.s32.totalorder %s71, %s74
    %p80 = scmp.eq.s32.totalorder %s9, 0
    %p81 = por %p79, %p80
    %p82 = scmp.ne.s32.totalorder %s71, %s74
    %p83 = scmp.eq.s32.totalorder %s14, 1
    %p84 = por %p82, %p83
    %p85 = scmp.ne.s32.totalorder %s74, %s75
    %p86 = scmp.eq.s32.totalorder %s14, 0
    %p87 = por %p85, %p86
    %p88 = scmp.ne.s32.totalorder %s74, %s75
    %p89 = scmp.eq.s32.totalorder %s15, 1
    %p90 = por %p88, %p89
    %p92 = scmp.ne.s32.totalorder %s75, %s91
    %p93 = scmp.eq.s32.totalorder %s15, 0
    %p94 = por %p92, %p93
    %s95 = ssub.s32 %s9, %s16
    %p96 = scmp.eq.s32.totalorder %s95, 0
    %s98 = sadd.s32 %s97, 1
    %s99 = scalar_select %p96, %s97, %s98
    %p102 = pneg %p96
    %p103 = scmp.eq.s32.totalorder %s9, 1
    %p104 = por %p102, %p103
    %p105 = scmp.ne.s32.totalorder %s97, %s100
    %p106 = scmp.eq.s32.totalorder %s9, 0
    %p107 = por %p105, %p106
    %p108 = scmp.ne.s32.totalorder %s97, %s100
    %p109 = scmp.eq.s32.totalorder %s14, 1
    %p110 = por %p108, %p109
    %p111 = scmp.ne.s32.totalorder %s100, %s101
    %p112 = scmp.eq.s32.totalorder %s14, 0
    %p113 = por %p111, %p112
    %p114 = scmp.ne.s32.totalorder %s100, %s101
    %p115 = scmp.eq.s32.totalorder %s15, 1
    %p116 = por %p114, %p115
    %p118 = scmp.ne.s32.totalorder %s101, %s117
    %p119 = scmp.eq.s32.totalorder %s15, 0
    %p120 = por %p118, %p119
    %p121 = scmp.le.s32.totalorder 1, %s9
    %p122 = scmp.lt.s32.totalorder %s9, 3
    %p123 = pnand %p121, %p122
    %p124 = pneg %p123
    // Predicated region
    $region9: #{modular_transformer_forward.4} parent=5 // pred_check
      _
    $region10: #{modular_transformer_forward.4} parent=5 // pred_check_branch
      %126 = sbr.rel (%p123) target = $region12
    $region11: #{modular_transformer_forward.4} parent=5 // pred_region
      %s127 = ssub.s32 %s9, 1
    $region12: #{modular_transformer_forward.4} parent=5 // pred_fallthru
      _
    %p128 = scmp.lt.s32.totalorder %s9, 2
    // Predicated region
    $region13: #{modular_transformer_forward.4} parent=5 // pred_check
      %p129 = pneg %p128
    $region14: #{modular_transformer_forward.4} parent=5 // pred_check_branch
      %131 = sbr.rel (%p129) target = $region16
    $region15: #{modular_transformer_forward.4} parent=5 // pred_region
      // Predicated region
      $region17: #{modular_transformer_forward.4} parent=15 // pred_check
        %p132 = pneg %p29
      $region18: #{modular_transformer_forward.4} parent=15 // pred_check_branch
        %134 = sbr.rel (%p132) target = $region20
      $region19: #{modular_transformer_forward.4} parent=15 // pred_region
        %p135 = scmp.lt.s32.totalorder %s9, 1
        %s136 = scalar_select %p135, %s9, 1
        %s137 = smul.addr %s136, 4
        %s138 = smul.addr %s137, 4
        %s139 = scalar_lea.vmem %s0, %s138
      $region20: #{modular_transformer_forward.4} parent=15 // pred_fallthru
        _
      // Predicated region
      $region21: #{modular_transformer_forward.4} parent=15 // pred_check
        %p140 = pneg %p55
      $region22: #{modular_transformer_forward.4} parent=15 // pred_check_branch
        %142 = sbr.rel (%p140) target = $region24
      $region23: #{modular_transformer_forward.4} parent=15 // pred_region
        %p143 = scmp.lt.s32.totalorder %s9, 1
        %s144 = scalar_select %p143, %s9, 1
        %s145 = smul.addr %s144, 4
        %s146 = smul.addr %s145, 4
        %s147 = scalar_lea.vmem %s1, %s146
      $region24: #{modular_transformer_forward.4} parent=15 // pred_fallthru
        _
      // Predicated region
      $region25: #{modular_transformer_forward.4} parent=15 // pred_check
        %p148 = pneg %p81
      $region26: #{modular_transformer_forward.4} parent=15 // pred_check_branch
        %150 = sbr.rel (%p148) target = $region28
      $region27: #{modular_transformer_forward.4} parent=15 // pred_region
        %p151 = scmp.lt.s32.totalorder %s9, 1
        %s152 = scalar_select %p151, %s9, 1
        %s153 = smul.addr %s152, 4
        %s154 = smul.addr %s153, 4
        %s155 = scalar_lea.vmem %s2, %s154
      $region28: #{modular_transformer_forward.4} parent=15 // pred_fallthru
        _
    $region16: #{modular_transformer_forward.4} parent=5 // pred_fallthru
      _
    %p156 = scmp.le.s32.totalorder 1, %s9
    %p157 = scmp.lt.s32.totalorder %s9, 3
    %p158 = pnand %p156, %p157
    %p159 = pneg %p158
    // Predicated region
    $region29: #{modular_transformer_forward.4} parent=5 // pred_check
      _
    $region30: #{modular_transformer_forward.4} parent=5 // pred_check_branch
      %161 = sbr.rel (%p158) target = $region32
    $region31: #{modular_transformer_forward.4} parent=5 // pred_region
      %s162 = ssub.s32 %s9, 1
      %p163 = scmp.lt.s32.totalorder %s14, 1
      %s164 = scalar_select %p163, %s14, 1
      %s165 = smul.addr %s164, 4
      %s166 = smul.addr %s165, 4
      %s167 = scalar_lea.vmem %s0, %s166
      %p168 = pneg %p35
      %p169 = pneg %p32
      %p170 = scmp.lt.s32.totalorder %s14, 1
      %s171 = scalar_select %p170, %s14, 1
      %s172 = smul.addr %s171, 4
      %s173 = smul.addr %s172, 4
      %s174 = scalar_lea.vmem %s1, %s173
      %p175 = pneg %p61
      %p176 = pneg %p58
      %p177 = scmp.lt.s32.totalorder %s14, 1
      %s178 = scalar_select %p177, %s14, 1
      %s179 = smul.addr %s178, 4
      %s180 = smul.addr %s179, 4
      %s181 = scalar_lea.vmem %s2, %s180
      %p182 = pneg %p87
      %p183 = pneg %p84
      %p184 = pneg %p113
      %p185 = pneg %p110
      %p186 = scmp.lt.s32.totalorder %s14, 1
      %s187 = scalar_select %p186, %s14, 1
      %s188 = smul.addr %s187, 4
      %s189 = smul.addr %s188, 4
      %s190 = scalar_lea.vmem %s3, %s189
      %p191 = scmp.lt.s32.totalorder %s14, 1
      %s192 = scalar_select %p191, %s14, 1
      %s193 = smul.addr %s192, 4
      %s194 = smul.addr %s193, 4
      %s195 = scalar_lea.vmem %s0, %s194
      %p196 = scmp.lt.s32.totalorder %s14, 1
      %s197 = scalar_select %p196, %s14, 1
      %s198 = smul.addr %s197, 4
      %s199 = smul.addr %s198, 4
      %s200 = scalar_lea.vmem %s1, %s199
      %p201 = scmp.lt.s32.totalorder %s14, 1
      %s202 = scalar_select %p201, %s14, 1
      %s203 = smul.addr %s202, 4
      %s204 = smul.addr %s203, 4
      %s205 = scalar_lea.vmem %s2, %s204
      %p206 = scmp.lt.s32.totalorder %s14, 1
      %s207 = scalar_select %p206, %s14, 1
      %s208 = smul.addr %s207, 4
      %s209 = smul.addr %s208, 4
      %s210 = scalar_lea.vmem %s3, %s209
      %v212 = vld [vmem:[%s195] sm:$0xf]
      %v213 = vld [vmem:[%s195 + $0x4] sm:$0xf]
      %v214 = vld [vmem:[%s195 + $0x8] sm:$0xf]
      %v215 = vld [vmem:[%s195 + $0xc] sm:$0xf]
      %v216 = vld [vmem:[%s200] sm:$0xf]
      %v217 = vld [vmem:[%s200 + $0x4] sm:$0xf]
      %v218 = vld [vmem:[%s200 + $0x8] sm:$0xf]
      %v219 = vld [vmem:[%s200 + $0xc] sm:$0xf]
      %v220 = vld [vmem:[%s205] sm:$0xf]
      %v221 = vld [vmem:[%s205 + $0x4] sm:$0xf]
      %v222 = vld [vmem:[%s205 + $0x8] sm:$0xf]
      %v223 = vld [vmem:[%s205 + $0xc] sm:$0xf]
      %vm224 = vcmask 64512
      %v226 = vsel %vm224, %v212, 0
      %v229 = vsel %vm224, %v216, 0
      %231 = vmatprep.subr.bf16.mxu0 0
      %232 = vmatpush1.bf16.xpose.msra.mxu0 %v229
      %233 = vmatprep.subr.bf16.mxu0 0
      %234 = vmatpush1.bf16.xpose.msra.mxu0 0
      %235 = vmatprep.subr.bf16.mxu0 0
      %236 = vmatpush1.bf16.xpose.msra.mxu0 0
      %237 = vmatprep.subr.bf16.mxu0 0
      %238 = vmatpush1.bf16.xpose.msra.mxu0 0
      %239 = vmatprep.subr.bf16.mxu0 0
      %240 = vmatpush1.bf16.xpose.msra.mxu0 0
      %241 = vmatprep.subr.bf16.mxu0 0
      %242 = vmatpush1.bf16.xpose.msra.mxu0 0
      %243 = vmatprep.subr.bf16.mxu0 0
      %244 = vmatpush1.bf16.xpose.msra.mxu0 0
      %245 = vmatprep.subr.bf16.mxu0 0
      %246 = vmatpush1.bf16.xpose.msra.mxu0 0
      %247 = vmatprep.subr.bf16.mxu0 0
      %248 = vmatpush1.bf16.xpose.msra.mxu0 0
      %249 = vmatprep.subr.bf16.mxu0 0
      %250 = vmatpush1.bf16.xpose.msra.mxu0 0
      %251 = vmatprep.subr.bf16.mxu0 0
      %252 = vmatpush1.bf16.xpose.msra.mxu0 0
      %253 = vmatprep.subr.bf16.mxu0 0
      %254 = vmatpush1.bf16.xpose.msra.mxu0 0
      %255 = vmatprep.subr.bf16.mxu0 0
      %256 = vmatpush1.bf16.xpose.msra.mxu0 0
      %257 = vmatprep.subr.bf16.mxu0 0
      %258 = vmatpush1.bf16.xpose.msra.mxu0 0
      %259 = vmatprep.subr.bf16.mxu0 0
      %260 = vmatpush1.bf16.xpose.msra.mxu0 0
      %261 = vmatprep.subr.bf16.mxu0 0
      %262 = vmatpush1.bf16.xpose.msra.mxu0 0
      %263 = vmatprep.mubr.bf16.mxu0 0
      %264 = vmatmul.mubr.bf16.gmra.mrb[0].mxu0 %v226
      %v265 = vpop.f32.mrb[0].mxu0
      %v266 = vadd.f32 0.0, %v265
      %v267 = vpop.f32.mrb[0].mxu0
      %v268 = vpop.f32.mrb[0].mxu0
      %v269 = vpop.f32.mrb[0].mxu0
      %270 = vdwg.mxu0
      %v272 = vsel %vm224, %v213, 0
      %v275 = vsel %vm224, %v217, 0
      %277 = vmatprep.subr.bf16.mxu0 0
      %278 = vmatpush1.bf16.xpose.msra.mxu0 %v275
      %279 = vmatprep.subr.bf16.mxu0 0
      %280 = vmatpush1.bf16.xpose.msra.mxu0 0
      %281 = vmatprep.subr.bf16.mxu0 0
      %282 = vmatpush1.bf16.xpose.msra.mxu0 0
      %283 = vmatprep.subr.bf16.mxu0 0
      %284 = vmatpush1.bf16.xpose.msra.mxu0 0
      %285 = vmatprep.subr.bf16.mxu0 0
      %286 = vmatpush1.bf16.xpose.msra.mxu0 0
      %287 = vmatprep.subr.bf16.mxu0 0
      %288 = vmatpush1.bf16.xpose.msra.mxu0 0
      %289 = vmatprep.subr.bf16.mxu0 0
      %290 = vmatpush1.bf16.xpose.msra.mxu0 0
      %291 = vmatprep.subr.bf16.mxu0 0
      %292 = vmatpush1.bf16.xpose.msra.mxu0 0
      %293 = vmatprep.subr.bf16.mxu0 0
      %294 = vmatpush1.bf16.xpose.msra.mxu0 0
      %295 = vmatprep.subr.bf16.mxu0 0
      %296 = vmatpush1.bf16.xpose.msra.mxu0 0
      %297 = vmatprep.subr.bf16.mxu0 0
      %298 = vmatpush1.bf16.xpose.msra.mxu0 0
      %299 = vmatprep.subr.bf16.mxu0 0
      %300 = vmatpush1.bf16.xpose.msra.mxu0 0
      %301 = vmatprep.subr.bf16.mxu0 0
      %302 = vmatpush1.bf16.xpose.msra.mxu0 0
      %303 = vmatprep.subr.bf16.mxu0 0
      %304 = vmatpush1.bf16.xpose.msra.mxu0 0
      %305 = vmatprep.subr.bf16.mxu0 0
      %306 = vmatpush1.bf16.xpose.msra.mxu0 0
      %307 = vmatprep.subr.bf16.mxu0 0
      %308 = vmatpush1.bf16.xpose.msra.mxu0 0
      %309 = vmatprep.mubr.bf16.mxu0 0
      %310 = vmatmul.mubr.bf16.gmra.mrb[0].mxu0 %v272
      %v311 = vpop.f32.mrb[0].mxu0
      %v312 = vadd.f32 0.0, %v311
      %v313 = vpop.f32.mrb[0].mxu0
      %v314 = vpop.f32.mrb[0].mxu0
      %v315 = vpop.f32.mrb[0].mxu0
      %316 = vdwg.mxu0
      %v318 = vsel %vm224, %v214, 0
      %v321 = vsel %vm224, %v218, 0
      %323 = vmatprep.subr.bf16.mxu0 0
      %324 = vmatpush1.bf16.xpose.msra.mxu0 %v321
      %325 = vmatprep.subr.bf16.mxu0 0
      %326 = vmatpush1.bf16.xpose.msra.mxu0 0
      %327 = vmatprep.subr.bf16.mxu0 0
      %328 = vmatpush1.bf16.xpose.msra.mxu0 0
      %329 = vmatprep.subr.bf16.mxu0 0
      %330 = vmatpush1.bf16.xpose.msra.mxu0 0
      %331 = vmatprep.subr.bf16.mxu0 0
      %332 = vmatpush1.bf16.xpose.msra.mxu0 0
      %333 = vmatprep.subr.bf16.mxu0 0
      %334 = vmatpush1.bf16.xpose.msra.mxu0 0
      %335 = vmatprep.subr.bf16.mxu0 0
      %336 = vmatpush1.bf16.xpose.msra.mxu0 0
      %337 = vmatprep.subr.bf16.mxu0 0
      %338 = vmatpush1.bf16.xpose.msra.mxu0 0
      %339 = vmatprep.subr.bf16.mxu0 0
      %340 = vmatpush1.bf16.xpose.msra.mxu0 0
      %341 = vmatprep.subr.bf16.mxu0 0
      %342 = vmatpush1.bf16.xpose.msra.mxu0 0
      %343 = vmatprep.subr.bf16.mxu0 0
      %344 = vmatpush1.bf16.xpose.msra.mxu0 0
      %345 = vmatprep.subr.bf16.mxu0 0
      %346 = vmatpush1.bf16.xpose.msra.mxu0 0
      %347 = vmatprep.subr.bf16.mxu0 0
      %348 = vmatpush1.bf16.xpose.msra.mxu0 0
      %349 = vmatprep.subr.bf16.mxu0 0
      %350 = vmatpush1.bf16.xpose.msra.mxu0 0
      %351 = vmatprep.subr.bf16.mxu0 0
      %352 = vmatpush1.bf16.xpose.msra.mxu0 0
      %353 = vmatprep.subr.bf16.mxu0 0
      %354 = vmatpush1.bf16.xpose.msra.mxu0 0
      %355 = vmatprep.mubr.bf16.mxu0 0
      %356 = vmatmul.mubr.bf16.gmra.mrb[0].mxu0 %v318
      %v357 = vpop.f32.mrb[0].mxu0
      %v358 = vadd.f32 0.0, %v357
      %v359 = vpop.f32.mrb[0].mxu0
      %v360 = vpop.f32.mrb[0].mxu0
      %v361 = vpop.f32.mrb[0].mxu0
      %362 = vdwg.mxu0
      %v364 = vsel %vm224, %v215, 0
      %v367 = vsel %vm224, %v219, 0
      %369 = vmatprep.subr.bf16.mxu0 0
      %370 = vmatpush1.bf16.xpose.msra.mxu0 %v367
      %371 = vmatprep.subr.bf16.mxu0 0
      %372 = vmatpush1.bf16.xpose.msra.mxu0 0
      %373 = vmatprep.subr.bf16.mxu0 0
      %374 = vmatpush1.bf16.xpose.msra.mxu0 0
      %375 = vmatprep.subr.bf16.mxu0 0
      %376 = vmatpush1.bf16.xpose.msra.mxu0 0
      %377 = vmatprep.subr.bf16.mxu0 0
      %378 = vmatpush1.bf16.xpose.msra.mxu0 0
      %379 = vmatprep.subr.bf16.mxu0 0
      %380 = vmatpush1.bf16.xpose.msra.mxu0 0
      %381 = vmatprep.subr.bf16.mxu0 0
      %382 = vmatpush1.bf16.xpose.msra.mxu0 0
      %383 = vmatprep.subr.bf16.mxu0 0
      %384 = vmatpush1.bf16.xpose.msra.mxu0 0
      %385 = vmatprep.subr.bf16.mxu0 0
      %386 = vmatpush1.bf16.xpose.msra.mxu0 0
      %387 = vmatprep.subr.bf16.mxu0 0
      %388 = vmatpush1.bf16.xpose.msra.mxu0 0
      %389 = vmatprep.subr.bf16.mxu0 0
      %390 = vmatpush1.bf16.xpose.msra.mxu0 0
      %391 = vmatprep.subr.bf16.mxu0 0
      %392 = vmatpush1.bf16.xpose.msra.mxu0 0
      %393 = vmatprep.subr.bf16.mxu0 0
      %394 = vmatpush1.bf16.xpose.msra.mxu0 0
      %395 = vmatprep.subr.bf16.mxu0 0
      %396 = vmatpush1.bf16.xpose.msra.mxu0 0
      %397 = vmatprep.subr.bf16.mxu0 0
      %398 = vmatpush1.bf16.xpose.msra.mxu0 0
      %399 = vmatprep.subr.bf16.mxu0 0
      %400 = vmatpush1.bf16.xpose.msra.mxu0 0
      %401 = vmatprep.mubr.bf16.mxu0 0
      %402 = vmatmul.mubr.bf16.gmra.mrb[0].mxu0 %v364
      %v403 = vpop.f32.mrb[0].mxu0
      %v404 = vadd.f32 0.0, %v403
      %v405 = vpop.f32.mrb[0].mxu0
      %v406 = vpop.f32.mrb[0].mxu0
      %v407 = vpop.f32.mrb[0].mxu0
      %408 = vdwg.mxu0
      %v409 = vmul.f32 %v266, 0.35355338
      %v410 = vmul.f32 %v312, 0.35355338
      %v411 = vmul.f32 %v358, 0.35355338
      %v412 = vmul.f32 %v404, 0.35355338
      %v413 = vlaneseq
      %v414 = vshrl.u32 %v413, 7
      %v415 = vlaneseq
      %v416 = vand.u32 %v415, 127
      %vm417 = vcmp.eq.s32.totalorder %v414, %v416
      %v418 = vsel %vm417, -inf, 0.0
      %v419 = vadd.f32 %v409, %v418
      %v420 = vadd.f32 %v410, %v418
      %v421 = vadd.f32 %v411, %v418
      %v422 = vadd.f32 %v412, %v418
      %v423 = vsel %vm224, %v419, -inf
      %424 = vmax.xlane.f32.xlu0 %v423
      %v425 = vpop.xlane.xlu0 %424
      %v426 = vsel %vm224, %v420, -inf
      %427 = vmax.xlane.f32.xlu0 %v426
      %v428 = vpop.xlane.xlu0 %427
      %v429 = vsel %vm224, %v421, -inf
      %430 = vmax.xlane.f32.xlu0 %v429
      %v431 = vpop.xlane.xlu0 %430
      %v432 = vsel %vm224, %v422, -inf
      %433 = vmax.xlane.f32.xlu0 %v432
      %v434 = vpop.xlane.xlu0 %433
      %v435 = vsub.f32 %v419, %v425
      %v436 = vsub.f32 %v420, %v428
      %v437 = vsub.f32 %v421, %v431
      %v438 = vsub.f32 %v422, %v434
      %v439 = vmul.f32 %v435, 1.442695
      %v440 = vpow.pop %v439
      %v441 = vmul.f32 %v436, 1.442695
      %v442 = vpow.pop %v441
      %v443 = vmul.f32 %v437, 1.442695
      %v444 = vpow.pop %v443
      %v445 = vmul.f32 %v438, 1.442695
      %v446 = vpow.pop %v445
      %v447 = vsel %vm224, %v440, 0.0
      %448 = vadd.xlane.f32.xlu0 %v447
      %v449 = vpop.xlane.xlu0 %448
      %v450 = vsel %vm224, %v442, 0.0
      %451 = vadd.xlane.f32.xlu0 %v450
      %v452 = vpop.xlane.xlu0 %451
      %v453 = vsel %vm224, %v444, 0.0
      %454 = vadd.xlane.f32.xlu0 %v453
      %v455 = vpop.xlane.xlu0 %454
      %v456 = vsel %vm224, %v446, 0.0
      %457 = vadd.xlane.f32.xlu0 %v456
      %v458 = vpop.xlane.xlu0 %457
      %v459 = vrcp.pop %v449
      %v460 = vrcp.pop %v452
      %v461 = vrcp.pop %v455
      %v462 = vrcp.pop %v458
      %v463 = vmul.f32 %v440, %v459
      %v464 = vmul.f32 %v442, %v460
      %v465 = vmul.f32 %v444, %v461
      %v466 = vmul.f32 %v446, %v462
      %v467 = vpack.c.bf16 %v463, %v463
      %v468 = vpack.c.bf16 %v464, %v464
      %v469 = vpack.c.bf16 %v465, %v465
      %v470 = vpack.c.bf16 %v466, %v466
      %v472 = vsel %vm224, %v467, 0
      %vm474 = vcmask 1043456
      %v476 = vsel %vm474, %v220, 0
      %478 = vmatprep.subr.bf16.mxu0 0
      %479 = vmatpush1.bf16.msra.mxu0 %v476
      %480 = vmatprep.subr.bf16.mxu0 0
      %481 = vmatpush1.bf16.msra.mxu0 0
      %482 = vmatprep.subr.bf16.mxu0 0
      %483 = vmatpush1.bf16.msra.mxu0 0
      %484 = vmatprep.subr.bf16.mxu0 0
      %485 = vmatpush1.bf16.msra.mxu0 0
      %486 = vmatprep.subr.bf16.mxu0 0
      %487 = vmatpush1.bf16.msra.mxu0 0
      %488 = vmatprep.subr.bf16.mxu0 0
      %489 = vmatpush1.bf16.msra.mxu0 0
      %490 = vmatprep.subr.bf16.mxu0 0
      %491 = vmatpush1.bf16.msra.mxu0 0
      %492 = vmatprep.subr.bf16.mxu0 0
      %493 = vmatpush1.bf16.msra.mxu0 0
      %494 = vmatprep.subr.bf16.mxu0 0
      %495 = vmatpush1.bf16.msra.mxu0 0
      %496 = vmatprep.subr.bf16.mxu0 0
      %497 = vmatpush1.bf16.msra.mxu0 0
      %498 = vmatprep.subr.bf16.mxu0 0
      %499 = vmatpush1.bf16.msra.mxu0 0
      %500 = vmatprep.subr.bf16.mxu0 0
      %501 = vmatpush1.bf16.msra.mxu0 0
      %502 = vmatprep.subr.bf16.mxu0 0
      %503 = vmatpush1.bf16.msra.mxu0 0
      %504 = vmatprep.subr.bf16.mxu0 0
      %505 = vmatpush1.bf16.msra.mxu0 0
      %506 = vmatprep.subr.bf16.mxu0 0
      %507 = vmatpush1.bf16.msra.mxu0 0
      %508 = vmatprep.subr.bf16.mxu0 0
      %509 = vmatpush1.bf16.msra.mxu0 0
      %510 = vmatprep.mubr.bf16.mxu0 0
      %511 = vmatmul.mubr.bf16.gmra.mrb[0].mxu0 %v472
      %v512 = vpop.f32.mrb[0].mxu0
      %v513 = vadd.f32 0.0, %v512
      %v514 = vpop.f32.mrb[0].mxu0
      %v515 = vpop.f32.mrb[0].mxu0
      %v516 = vpop.f32.mrb[0].mxu0
      %517 = vdwg.mxu0
      %v519 = vsel %vm224, %v468, 0
      %v522 = vsel %vm474, %v221, 0
      %524 = vmatprep.subr.bf16.mxu0 0
      %525 = vmatpush1.bf16.msra.mxu0 %v522
      %526 = vmatprep.subr.bf16.mxu0 0
      %527 = vmatpush1.bf16.msra.mxu0 0
      %528 = vmatprep.subr.bf16.mxu0 0
      %529 = vmatpush1.bf16.msra.mxu0 0
      %530 = vmatprep.subr.bf16.mxu0 0
      %531 = vmatpush1.bf16.msra.mxu0 0
      %532 = vmatprep.subr.bf16.mxu0 0
      %533 = vmatpush1.bf16.msra.mxu0 0
      %534 = vmatprep.subr.bf16.mxu0 0
      %535 = vmatpush1.bf16.msra.mxu0 0
      %536 = vmatprep.subr.bf16.mxu0 0
      %537 = vmatpush1.bf16.msra.mxu0 0
      %538 = vmatprep.subr.bf16.mxu0 0
      %539 = vmatpush1.bf16.msra.mxu0 0
      %540 = vmatprep.subr.bf16.mxu0 0
      %541 = vmatpush1.bf16.msra.mxu0 0
      %542 = vmatprep.subr.bf16.mxu0 0
      %543 = vmatpush1.bf16.msra.mxu0 0
      %544 = vmatprep.subr.bf16.mxu0 0
      %545 = vmatpush1.bf16.msra.mxu0 0
      %546 = vmatprep.subr.bf16.mxu0 0
      %547 = vmatpush1.bf16.msra.mxu0 0
      %548 = vmatprep.subr.bf16.mxu0 0
      %549 = vmatpush1.bf16.msra.mxu0 0
      %550 = vmatprep.subr.bf16.mxu0 0
      %551 = vmatpush1.bf16.msra.mxu0 0
      %552 = vmatprep.subr.bf16.mxu0 0
      %553 = vmatpush1.bf16.msra.mxu0 0
      %554 = vmatprep.subr.bf16.mxu0 0
      %555 = vmatpush1.bf16.msra.mxu0 0
      %556 = vmatprep.mubr.bf16.mxu0 0
      %557 = vmatmul.mubr.bf16.gmra.mrb[0].mxu0 %v519
      %v558 = vpop.f32.mrb[0].mxu0
      %v559 = vadd.f32 0.0, %v558
      %v560 = vpop.f32.mrb[0].mxu0
      %v561 = vpop.f32.mrb[0].mxu0
      %v562 = vpop.f32.mrb[0].mxu0
      %563 = vdwg.mxu0
      %v565 = vsel %vm224, %v469, 0
      %v568 = vsel %vm474, %v222, 0
      %570 = vmatprep.subr.bf16.mxu0 0
      %571 = vmatpush1.bf16.msra.mxu0 %v568
      %572 = vmatprep.subr.bf16.mxu0 0
      %573 = vmatpush1.bf16.msra.mxu0 0
      %574 = vmatprep.subr.bf16.mxu0 0
      %575 = vmatpush1.bf16.msra.mxu0 0
      %576 = vmatprep.subr.bf16.mxu0 0
      %577 = vmatpush1.bf16.msra.mxu0 0
      %578 = vmatprep.subr.bf16.mxu0 0
      %579 = vmatpush1.bf16.msra.mxu0 0
      %580 = vmatprep.subr.bf16.mxu0 0
      %581 = vmatpush1.bf16.msra.mxu0 0
      %582 = vmatprep.subr.bf16.mxu0 0
      %583 = vmatpush1.bf16.msra.mxu0 0
      %584 = vmatprep.subr.bf16.mxu0 0
      %585 = vmatpush1.bf16.msra.mxu0 0
      %586 = vmatprep.subr.bf16.mxu0 0
      %587 = vmatpush1.bf16.msra.mxu0 0
      %588 = vmatprep.subr.bf16.mxu0 0
      %589 = vmatpush1.bf16.msra.mxu0 0
      %590 = vmatprep.subr.bf16.mxu0 0
      %591 = vmatpush1.bf16.msra.mxu0 0
      %592 = vmatprep.subr.bf16.mxu0 0
      %593 = vmatpush1.bf16.msra.mxu0 0
      %594 = vmatprep.subr.bf16.mxu0 0
      %595 = vmatpush1.bf16.msra.mxu0 0
      %596 = vmatprep.subr.bf16.mxu0 0
      %597 = vmatpush1.bf16.msra.mxu0 0
      %598 = vmatprep.subr.bf16.mxu0 0
      %599 = vmatpush1.bf16.msra.mxu0 0
      %600 = vmatprep.subr.bf16.mxu0 0
      %601 = vmatpush1.bf16.msra.mxu0 0
      %602 = vmatprep.mubr.bf16.mxu0 0
      %603 = vmatmul.mubr.bf16.gmra.mrb[0].mxu0 %v565
      %v604 = vpop.f32.mrb[0].mxu0
      %v605 = vadd.f32 0.0, %v604
      %v606 = vpop.f32.mrb[0].mxu0
      %v607 = vpop.f32.mrb[0].mxu0
      %v608 = vpop.f32.mrb[0].mxu0
      %609 = vdwg.mxu0
      %v611 = vsel %vm224, %v470, 0
      %v614 = vsel %vm474, %v223, 0
      %616 = vmatprep.subr.bf16.mxu0 0
      %617 = vmatpush1.bf16.msra.mxu0 %v614
      %618 = vmatprep.subr.bf16.mxu0 0
      %619 = vmatpush1.bf16.msra.mxu0 0
      %620 = vmatprep.subr.bf16.mxu0 0
      %621 = vmatpush1.bf16.msra.mxu0 0
      %622 = vmatprep.subr.bf16.mxu0 0
      %623 = vmatpush1.bf16.msra.mxu0 0
      %624 = vmatprep.subr.bf16.mxu0 0
      %625 = vmatpush1.bf16.msra.mxu0 0
      %626 = vmatprep.subr.bf16.mxu0 0
      %627 = vmatpush1.bf16.msra.mxu0 0
      %628 = vmatprep.subr.bf16.mxu0 0
      %629 = vmatpush1.bf16.msra.mxu0 0
      %630 = vmatprep.subr.bf16.mxu0 0
      %631 = vmatpush1.bf16.msra.mxu0 0
      %632 = vmatprep.subr.bf16.mxu0 0
      %633 = vmatpush1.bf16.msra.mxu0 0
      %634 = vmatprep.subr.bf16.mxu0 0
      %635 = vmatpush1.bf16.msra.mxu0 0
      %636 = vmatprep.subr.bf16.mxu0 0
      %637 = vmatpush1.bf16.msra.mxu0 0
      %638 = vmatprep.subr.bf16.mxu0 0
      %639 = vmatpush1.bf16.msra.mxu0 0
      %640 = vmatprep.subr.bf16.mxu0 0
      %641 = vmatpush1.bf16.msra.mxu0 0
      %642 = vmatprep.subr.bf16.mxu0 0
      %643 = vmatpush1.bf16.msra.mxu0 0
      %644 = vmatprep.subr.bf16.mxu0 0
      %645 = vmatpush1.bf16.msra.mxu0 0
      %646 = vmatprep.subr.bf16.mxu0 0
      %647 = vmatpush1.bf16.msra.mxu0 0
      %648 = vmatprep.mubr.bf16.mxu0 0
      %649 = vmatmul.mubr.bf16.gmra.mrb[0].mxu0 %v611
      %v650 = vpop.f32.mrb[0].mxu0
      %v651 = vadd.f32 0.0, %v650
      %v652 = vpop.f32.mrb[0].mxu0
      %v653 = vpop.f32.mrb[0].mxu0
      %v654 = vpop.f32.mrb[0].mxu0
      %655 = vdwg.mxu0
      %v656 = vpack.c.bf16 %v513, %v513
      %v657 = vpack.c.bf16 %v559, %v559
      %v658 = vpack.c.bf16 %v605, %v605
      %v659 = vpack.c.bf16 %v651, %v651
      %vm660 = vcmask 60416
      %661 = vst.msk [vmem:[%s210] sm:$0xf] %vm660, %v656
      %662 = vst.msk [vmem:[%s210 + $0x4] sm:$0xf] %vm660, %v657
      %663 = vst.msk [vmem:[%s210 + $0x8] sm:$0xf] %vm660, %v658
      %664 = vst.msk [vmem:[%s210 + $0xc] sm:$0xf] %vm660, %v659
      %p665 = scmp.lt.s32.totalorder %s14, 1
      %s666 = scalar_select %p665, %s14, 1
      %s667 = smul.addr %s666, 4
      %s668 = smul.addr %s667, 4
      %s669 = scalar_lea.vmem %s3, %s668
      // Predicated region
      $region33: #{modular_transformer_forward.4} parent=31 // pred_check
        %p670 = pneg %p110
      $region34: #{modular_transformer_forward.4} parent=31 // pred_check_branch
        %672 = sbr.rel (%p670) target = $region36
      $region35: #{modular_transformer_forward.4} parent=31 // pred_region
        _
      $region36: #{modular_transformer_forward.4} parent=31 // pred_fallthru
        _
    $region32: #{modular_transformer_forward.4} parent=5 // pred_fallthru
      _
    %p673 = scmp.le.s32.totalorder 2, %s9
    // Predicated region
    $region37: #{modular_transformer_forward.4} parent=5 // pred_check
      %p674 = pneg %p673
    $region38: #{modular_transformer_forward.4} parent=5 // pred_check_branch
      %676 = sbr.rel (%p674) target = $region40
    $region39: #{modular_transformer_forward.4} parent=5 // pred_region
      %s677 = ssub.s32 %s9, 2
      // Predicated region
      $region41: #{modular_transformer_forward.4} parent=39 // pred_check
        %p678 = pneg %p116
      $region42: #{modular_transformer_forward.4} parent=39 // pred_check_branch
        %680 = sbr.rel (%p678) target = $region44
      $region43: #{modular_transformer_forward.4} parent=39 // pred_region
        %p681 = scmp.lt.s32.totalorder %s15, 1
        %s682 = scalar_select %p681, %s15, 1
        %s683 = smul.addr %s682, 4
        %s684 = smul.addr %s683, 4
        %s685 = scalar_lea.vmem %s3, %s684
      $region44: #{modular_transformer_forward.4} parent=39 // pred_fallthru
        _
    $region40: #{modular_transformer_forward.4} parent=5 // pred_fallthru
      _
  $region6: #{modular_transformer_forward.4} parent=0 // loop_footer
    %s13 = sadd.s32 1, %s9
  $region7: #{modular_transformer_forward.4} parent=0 // loop_footer_branch
    %8 = sbr.rel target = $region3
  $region8: #{modular_transformer_forward.4} parent=0 // loop_exit
    _

// kernel: modular_transformer_forward.5
$region0: #{modular_transformer_forward.5}
  #allocation0 [shape = 'u32[]', space=smem, size = 0x4, offset = 0x4, fixed_abs, tag = 'smem constant byte address 0x4 - core index']
  #allocation1 [shape = 'u32[144,128]{1,0:T(1,128)}', space=vmem, size = 0x12000, scoped, tag = 'internal scratch']
  %s0 = inlined_call_operand.vmem [shape: bf16[16,32], index: 0, kind: input, shape index: {}]
  %s1 = inlined_call_operand.vmem [shape: bf16[16,16], index: 1, kind: input, shape index: {}]
  %s2 = inlined_call_operand.vmem [shape: bf16[32,128], index: 2, kind: input, shape index: {}]
  %s3 = inlined_call_operand.vmem [shape: bf16[16,128], index: 3, kind: input, shape index: {}]
  %s4 = inlined_call_operand.vmem [shape: f32[1,128], index: 4, kind: input, shape index: {}]
  %s5 = inlined_call_operand.vmem [shape: bf16[128,128], index: 5, kind: input, shape index: {}]
  %s6 = inlined_call_operand.vmem [shape: f32[1,128], index: 6, kind: input, shape index: {}]
  %s7 = inlined_call_operand.vmem [shape: f32[16,128], index: 7, kind: output, shape index: {}]
  %s8 = sld [smem:[#allocation0]]
  $region38: #{modular_transformer_forward.5} parent=0
    _
  %s10 = ssub.s32 1, %s8
  %s11 = scalar_select 0, %s10, %s8
  // Predicated region
  $region2: #{modular_transformer_forward.5} parent=0 // pred_check
    _
  $region3: #{modular_transformer_forward.5} parent=0 // pred_check_branch
    %13 = sbr.rel (0) target = $region5
  $region4: #{modular_transformer_forward.5} parent=0 // pred_region
    _
  $region5: #{modular_transformer_forward.5} parent=0 // pred_fallthru
    _
  // Predicated region
  $region6: #{modular_transformer_forward.5} parent=0 // pred_check
    _
  $region7: #{modular_transformer_forward.5} parent=0 // pred_check_branch
    %15 = sbr.rel (0) target = $region9
  $region8: #{modular_transformer_forward.5} parent=0 // pred_region
    _
  $region9: #{modular_transformer_forward.5} parent=0 // pred_fallthru
    _
  // Predicated region
  $region10: #{modular_transformer_forward.5} parent=0 // pred_check
    _
  $region11: #{modular_transformer_forward.5} parent=0 // pred_check_branch
    %17 = sbr.rel (0) target = $region13
  $region12: #{modular_transformer_forward.5} parent=0 // pred_region
    _
  $region13: #{modular_transformer_forward.5} parent=0 // pred_fallthru
    _
  // Predicated region
  $region14: #{modular_transformer_forward.5} parent=0 // pred_check
    _
  $region15: #{modular_transformer_forward.5} parent=0 // pred_check_branch
    %19 = sbr.rel (0) target = $region17
  $region16: #{modular_transformer_forward.5} parent=0 // pred_region
    _
  $region17: #{modular_transformer_forward.5} parent=0 // pred_fallthru
    _
  // Predicated region
  $region18: #{modular_transformer_forward.5} parent=0 // pred_check
    _
  $region19: #{modular_transformer_forward.5} parent=0 // pred_check_branch
    %21 = sbr.rel (0) target = $region21
  $region20: #{modular_transformer_forward.5} parent=0 // pred_region
    _
  $region21: #{modular_transformer_forward.5} parent=0 // pred_fallthru
    _
  // Predicated region
  $region22: #{modular_transformer_forward.5} parent=0 // pred_check
    _
  $region23: #{modular_transformer_forward.5} parent=0 // pred_check_branch
    %23 = sbr.rel (0) target = $region25
  $region24: #{modular_transformer_forward.5} parent=0 // pred_region
    _
  $region25: #{modular_transformer_forward.5} parent=0 // pred_fallthru
    _
  // Predicated region
  $region26: #{modular_transformer_forward.5} parent=0 // pred_check
    _
  $region27: #{modular_transformer_forward.5} parent=0 // pred_check_branch
    %25 = sbr.rel (0) target = $region29
  $region28: #{modular_transformer_forward.5} parent=0 // pred_region
    _
  $region29: #{modular_transformer_forward.5} parent=0 // pred_fallthru
    _
  %v27 = vld [vmem:[%s0] sm:$0xf]
  %v28 = vld [vmem:[%s0 + $0x4] sm:$0xf]
  %v29 = vld [vmem:[%s2] sm:$0xf]
  %v30 = vld [vmem:[%s2 + $0x4] sm:$0xf]
  %v31 = vld [vmem:[%s2 + $0x8] sm:$0xf]
  %v32 = vld [vmem:[%s2 + $0xc] sm:$0xf]
  %v33 = vld [vmem:[%s1] sm:$0xf]
  %v34 = vld [vmem:[%s1 + $0x4] sm:$0xf]
  %v35 = vld [vmem:[%s3] sm:$0xf]
  %v36 = vld [vmem:[%s3 + $0x4] sm:$0xf]
  %v39 = vunpack.c.l.b16 %v33
  %v40 = vunpack.c.l.b16 %v34
  %v41 = vpack.c.b16 %v40, %v39
  %v44 = vunpack.c.l.b16 %v35
  %v45 = vunpack.c.l.b16 %v36
  %v46 = vpack.c.b16 %v45, %v44
  %vm48 = vcmask 130048
  %v50 = vsel %vm48, %v41, 0
  %52 = vmatprep.subr.bf16.mxu0 0
  %53 = vmatpush1.bf16.msra.mxu0 %v46
  %54 = vmatprep.subr.bf16.mxu0 0
  %55 = vmatpush1.bf16.msra.mxu0 0
  %56 = vmatprep.subr.bf16.mxu0 0
  %57 = vmatpush1.bf16.msra.mxu0 0
  %58 = vmatprep.subr.bf16.mxu0 0
  %59 = vmatpush1.bf16.msra.mxu0 0
  %60 = vmatprep.subr.bf16.mxu0 0
  %61 = vmatpush1.bf16.msra.mxu0 0
  %62 = vmatprep.subr.bf16.mxu0 0
  %63 = vmatpush1.bf16.msra.mxu0 0
  %64 = vmatprep.subr.bf16.mxu0 0
  %65 = vmatpush1.bf16.msra.mxu0 0
  %66 = vmatprep.subr.bf16.mxu0 0
  %67 = vmatpush1.bf16.msra.mxu0 0
  %68 = vmatprep.subr.bf16.mxu0 0
  %69 = vmatpush1.bf16.msra.mxu0 0
  %70 = vmatprep.subr.bf16.mxu0 0
  %71 = vmatpush1.bf16.msra.mxu0 0
  %72 = vmatprep.subr.bf16.mxu0 0
  %73 = vmatpush1.bf16.msra.mxu0 0
  %74 = vmatprep.subr.bf16.mxu0 0
  %75 = vmatpush1.bf16.msra.mxu0 0
  %76 = vmatprep.subr.bf16.mxu0 0
  %77 = vmatpush1.bf16.msra.mxu0 0
  %78 = vmatprep.subr.bf16.mxu0 0
  %79 = vmatpush1.bf16.msra.mxu0 0
  %80 = vmatprep.subr.bf16.mxu0 0
  %81 = vmatpush1.bf16.msra.mxu0 0
  %82 = vmatprep.subr.bf16.mxu0 0
  %83 = vmatpush1.bf16.msra.mxu0 0
  %84 = vmatprep.mubr.bf16.mxu0 0
  %85 = vmatmul.mubr.bf16.gmra.mrb[0].mxu0 %v50
  %v86 = vpop.f32.mrb[0].mxu0
  %v87 = vadd.f32 0.0, %v86
  %v88 = vpop.f32.mrb[0].mxu0
  %v89 = vpop.f32.mrb[0].mxu0
  %v90 = vadd.f32 0.0, %v89
  %v91 = vpop.f32.mrb[0].mxu0
  %92 = vdwg.mxu0
  %v95 = vunpack.c.l.b16 %v27
  %v96 = vunpack.c.l.b16 %v28
  %v97 = vpack.c.b16 %v96, %v95
  %v102 = vunpack.c.l.b16 %v29
  %v103 = vunpack.c.l.b16 %v30
  %v104 = vunpack.c.l.b16 %v31
  %v105 = vunpack.c.l.b16 %v32
  %v106 = vpack.c.b16 %v103, %v102
  %v107 = vpack.c.b16 %v105, %v104
  %vm110 = vcmask 261120
  %v112 = vsel %vm110, %v97, 0
  %114 = vmatprep.subr.bf16.mxu0 0
  %115 = vmatpush1.bf16.msra.mxu0 %v106
  %116 = vmatprep.subr.bf16.mxu0 0
  %117 = vmatpush1.bf16.msra.mxu0 %v107
  %118 = vmatprep.subr.bf16.mxu0 0
  %119 = vmatpush1.bf16.msra.mxu0 0
  %120 = vmatprep.subr.bf16.mxu0 0
  %121 = vmatpush1.bf16.msra.mxu0 0
  %122 = vmatprep.subr.bf16.mxu0 0
  %123 = vmatpush1.bf16.msra.mxu0 0
  %124 = vmatprep.subr.bf16.mxu0 0
  %125 = vmatpush1.bf16.msra.mxu0 0
  %126 = vmatprep.subr.bf16.mxu0 0
  %127 = vmatpush1.bf16.msra.mxu0 0
  %128 = vmatprep.subr.bf16.mxu0 0
  %129 = vmatpush1.bf16.msra.mxu0 0
  %130 = vmatprep.subr.bf16.mxu0 0
  %131 = vmatpush1.bf16.msra.mxu0 0
  %132 = vmatprep.subr.bf16.mxu0 0
  %133 = vmatpush1.bf16.msra.mxu0 0
  %134 = vmatprep.subr.bf16.mxu0 0
  %135 = vmatpush1.bf16.msra.mxu0 0
  %136 = vmatprep.subr.bf16.mxu0 0
  %137 = vmatpush1.bf16.msra.mxu0 0
  %138 = vmatprep.subr.bf16.mxu0 0
  %139 = vmatpush1.bf16.msra.mxu0 0
  %140 = vmatprep.subr.bf16.mxu0 0
  %141 = vmatpush1.bf16.msra.mxu0 0
  %142 = vmatprep.subr.bf16.mxu0 0
  %143 = vmatpush1.bf16.msra.mxu0 0
  %144 = vmatprep.subr.bf16.mxu0 0
  %145 = vmatpush1.bf16.msra.mxu0 0
  %146 = vmatprep.mubr.bf16.mxu0 0
  %147 = vmatmul.mubr.bf16.gmra.mrb[0].mxu0 %v112
  %v148 = vpop.f32.mrb[0].mxu0
  %v149 = vadd.f32 %v87, %v148
  %v150 = vpop.f32.mrb[0].mxu0
  %v151 = vpop.f32.mrb[0].mxu0
  %v152 = vadd.f32 %v90, %v151
  %v153 = vpop.f32.mrb[0].mxu0
  %154 = vdwg.mxu0
  %v155 = vld [vmem:[%s4] sm:$0x1]
  %v157 = vlaneseq
  %v158 = vshrl.u32 %v157, 7
  %v159 = vsub.s32 0, %v158
  %v160 = vrot.slane %v155, %v159
  %v162 = vadd.f32 %v149, %v160
  %v163 = vadd.f32 %v152, %v160
  %v164 = vmax.f32 %v162, 0.0
  %v165 = vmax.f32 %v163, 0.0
  %v166 = vpack.c.bf16 %v165, %v164
  %v167 = vld [vmem:[%s5] sm:$0xf]
  %v168 = vld [vmem:[%s5 + $0x4] sm:$0xf]
  %v169 = vld [vmem:[%s5 + $0x8] sm:$0xf]
  %v170 = vld [vmem:[%s5 + $0xc] sm:$0xf]
  %v171 = vld [vmem:[%s5 + $0x10] sm:$0xf]
  %v172 = vld [vmem:[%s5 + $0x14] sm:$0xf]
  %v173 = vld [vmem:[%s5 + $0x18] sm:$0xf]
  %v174 = vld [vmem:[%s5 + $0x1c] sm:$0xf]
  %v175 = vld [vmem:[%s5 + $0x20] sm:$0xf]
  %v176 = vld [vmem:[%s5 + $0x24] sm:$0xf]
  %v177 = vld [vmem:[%s5 + $0x28] sm:$0xf]
  %v178 = vld [vmem:[%s5 + $0x2c] sm:$0xf]
  %v179 = vld [vmem:[%s5 + $0x30] sm:$0xf]
  %v180 = vld [vmem:[%s5 + $0x34] sm:$0xf]
  %v181 = vld [vmem:[%s5 + $0x38] sm:$0xf]
  %v182 = vld [vmem:[%s5 + $0x3c] sm:$0xf]
  %v183 = vld [vmem:[%s6] sm:$0x1]
  %v185 = vlaneseq
  %v186 = vshrl.u32 %v185, 7
  %v187 = vsub.s32 0, %v186
  %v188 = vrot.slane %v183, %v187
  %v206 = vunpack.c.l.b16 %v167
  %v207 = vunpack.c.l.b16 %v168
  %v208 = vunpack.c.l.b16 %v169
  %v209 = vunpack.c.l.b16 %v170
  %v210 = vunpack.c.l.b16 %v171
  %v211 = vunpack.c.l.b16 %v172
  %v212 = vunpack.c.l.b16 %v173
  %v213 = vunpack.c.l.b16 %v174
  %v214 = vunpack.c.l.b16 %v175
  %v215 = vunpack.c.l.b16 %v176
  %v216 = vunpack.c.l.b16 %v177
  %v217 = vunpack.c.l.b16 %v178
  %v218 = vunpack.c.l.b16 %v179
  %v219 = vunpack.c.l.b16 %v180
  %v220 = vunpack.c.l.b16 %v181
  %v221 = vunpack.c.l.b16 %v182
  %v222 = vpack.c.b16 %v207, %v206
  %v223 = vpack.c.b16 %v209, %v208
  %v224 = vpack.c.b16 %v211, %v210
  %v225 = vpack.c.b16 %v213, %v212
  %v226 = vpack.c.b16 %v215, %v214
  %v227 = vpack.c.b16 %v217, %v216
  %v228 = vpack.c.b16 %v219, %v218
  %v229 = vpack.c.b16 %v221, %v220
  %238 = vmatprep.subr.bf16.mxu0 0
  %239 = vmatpush1.bf16.msra.mxu0 %v222
  %240 = vmatprep.subr.bf16.mxu0 0
  %241 = vmatpush1.bf16.msra.mxu0 %v223
  %242 = vmatprep.subr.bf16.mxu0 0
  %243 = vmatpush1.bf16.msra.mxu0 %v224
  %244 = vmatprep.subr.bf16.mxu0 0
  %245 = vmatpush1.bf16.msra.mxu0 %v225
  %246 = vmatprep.subr.bf16.mxu0 0
  %247 = vmatpush1.bf16.msra.mxu0 %v226
  %248 = vmatprep.subr.bf16.mxu0 0
  %249 = vmatpush1.bf16.msra.mxu0 %v227
  %250 = vmatprep.subr.bf16.mxu0 0
  %251 = vmatpush1.bf16.msra.mxu0 %v228
  %252 = vmatprep.subr.bf16.mxu0 0
  %253 = vmatpush1.bf16.msra.mxu0 %v229
  %254 = vmatprep.subr.bf16.mxu0 0
  %255 = vmatpush1.bf16.msra.mxu0 0
  %256 = vmatprep.subr.bf16.mxu0 0
  %257 = vmatpush1.bf16.msra.mxu0 0
  %258 = vmatprep.subr.bf16.mxu0 0
  %259 = vmatpush1.bf16.msra.mxu0 0
  %260 = vmatprep.subr.bf16.mxu0 0
  %261 = vmatpush1.bf16.msra.mxu0 0
  %262 = vmatprep.subr.bf16.mxu0 0
  %263 = vmatpush1.bf16.msra.mxu0 0
  %264 = vmatprep.subr.bf16.mxu0 0
  %265 = vmatpush1.bf16.msra.mxu0 0
  %266 = vmatprep.subr.bf16.mxu0 0
  %267 = vmatpush1.bf16.msra.mxu0 0
  %268 = vmatprep.subr.bf16.mxu0 0
  %269 = vmatpush1.bf16.msra.mxu0 0
  %270 = vmatprep.mubr.bf16.mxu0 0
  %271 = vmatmul.mubr.bf16.gmra.mrb[0].mxu0 %v166
  %v272 = vpop.f32.mrb[0].mxu0
  %v273 = vadd.f32 %v188, %v272
  %v274 = vpop.f32.mrb[0].mxu0
  %v275 = vpop.f32.mrb[0].mxu0
  %v276 = vadd.f32 %v188, %v275
  %v277 = vpop.f32.mrb[0].mxu0
  %278 = vdwg.mxu0
  %279 = vst [vmem:[%s7] sm:$0xff] %v273
  %280 = vst [vmem:[%s7 + $0x8] sm:$0xff] %v276
  // Predicated region
  $region30: #{modular_transformer_forward.5} parent=0 // pred_check
    _
  $region31: #{modular_transformer_forward.5} parent=0 // pred_check_branch
    %282 = sbr.rel (0) target = $region33
  $region32: #{modular_transformer_forward.5} parent=0 // pred_region
    _
  $region33: #{modular_transformer_forward.5} parent=0 // pred_fallthru
    _
  // Predicated region
  $region34: #{modular_transformer_forward.5} parent=0 // pred_check
    _
  $region35: #{modular_transformer_forward.5} parent=0 // pred_check_branch
    %284 = sbr.rel (0) target = $region37
  $region36: #{modular_transformer_forward.5} parent=0 // pred_region
    _
  $region37: #{modular_transformer_forward.5} parent=0 // pred_fallthru
    _

</llo_original>
